<compile_context>
chip_gen: v5e
topology: v5e:2x2
jax: 0.10.0
libtpu: 0.0.40
codegen_flags: <defaults>
</compile_context>

<pallas_src>
import functools

import jax
import jax.numpy as jnp
from jax.experimental import pallas as pl
from jax.experimental.pallas import tpu as pltpu


VMEM_LIMIT = 48 * 1024 * 1024  # leaves headroom even on v7x (64 MiB physical)


def _pick_tile(dim, preferred, align):
    """Largest tile <= preferred that divides `dim` and is a multiple of `align`.
    Falls back to the full extent (always legal for BlockSpec)."""
    if dim <= preferred:
        return dim
    t = (preferred // align) * align
    while t >= align:
        if dim % t == 0:
            return t
        t -= align
    return dim


# ----------------------------------------------------------------------------
# Kernel 1: tiled matmul + bias (+ optional GELU) epilogue
# ----------------------------------------------------------------------------
def _matmul_bias_kernel(x_ref, w_ref, b_ref, o_ref, acc_ref, *, activation):
    k = pl.program_id(2)

    @pl.when(k == 0)
    def _():
        acc_ref[...] = jnp.zeros_like(acc_ref)

    acc_ref[...] += jnp.dot(
        x_ref[...], w_ref[...], preferred_element_type=jnp.float32
    )

    @pl.when(k == pl.num_programs(2) - 1)
    def _():
        y = acc_ref[...] + b_ref[...].astype(jnp.float32)
        if activation == "gelu":
            # TODO(synk): HF BERT uses exact erf-GELU; tanh approximation here.
            y = 0.5 * y * (1.0 + jnp.tanh(0.7978845608028654 * (y + 0.044715 * y * y * y)))
        o_ref[...] = y.astype(o_ref.dtype)


def linear(x, w, b, activation="none", out_dtype=jnp.bfloat16):
    """y = act(x @ w + b).  x:(M,K) bf16, w:(K,N) bf16, b:(N,) f32."""
    M, K = x.shape
    N = w.shape[1]
    tm = _pick_tile(M, 256, 8)
    tn = _pick_tile(N, 256, 128)
    tk = _pick_tile(K, 512, 128)
    grid = (M // tm, N // tn, K // tk)
    return pl.pallas_call(
        functools.partial(_matmul_bias_kernel, activation=activation),
        out_shape=jax.ShapeDtypeStruct((M, N), out_dtype),
        grid_spec=pltpu.PrefetchScalarGridSpec(
            num_scalar_prefetch=0,
            grid=grid,
            in_specs=[
                pl.BlockSpec((tm, tk), lambda i, j, k: (i, k)),
                pl.BlockSpec((tk, tn), lambda i, j, k: (k, j)),
                pl.BlockSpec((1, tn), lambda i, j, k: (0, j)),
            ],
            out_specs=pl.BlockSpec((tm, tn), lambda i, j, k: (i, j)),
            scratch_shapes=[pltpu.VMEM((tm, tn), jnp.float32)],
        ),
        compiler_params=pltpu.CompilerParams(
            dimension_semantics=("parallel", "parallel", "arbitrary"),
            vmem_limit_bytes=VMEM_LIMIT,
        ),
    )(x, w, b.reshape(1, N))


# ----------------------------------------------------------------------------
# Kernel 2: tiled matmul + bias + residual add + LayerNorm epilogue (full N)
# ----------------------------------------------------------------------------
def _matmul_bias_res_ln_kernel(
    x_ref, w_ref, b_ref, res_ref, g_ref, beta_ref, o_ref, acc_ref, *, eps
):
    k = pl.program_id(1)

    @pl.when(k == 0)
    def _():
        acc_ref[...] = jnp.zeros_like(acc_ref)

    acc_ref[...] += jnp.dot(
        x_ref[...], w_ref[...], preferred_element_type=jnp.float32
    )

    @pl.when(k == pl.num_programs(1) - 1)
    def _():
        h = (
            acc_ref[...]
            + b_ref[...].astype(jnp.float32)
            + res_ref[...].astype(jnp.float32)
        )
        mu = jnp.mean(h, axis=-1, keepdims=True)
        d = h - mu
        var = jnp.mean(d * d, axis=-1, keepdims=True)
        normed = d * jax.lax.rsqrt(var + eps)
        o_ref[...] = (
            normed * g_ref[...].astype(jnp.float32) + beta_ref[...].astype(jnp.float32)
        ).astype(o_ref.dtype)


def linear_res_ln(x, w, b, res, gamma, beta, eps=1e-12, out_dtype=jnp.bfloat16):
    """LayerNorm(res + x @ w + b).  N is kept whole (LN spans full hidden dim)."""
    M, K = x.shape
    N = w.shape[1]
    tm = _pick_tile(M, 256, 8)
    tk = _pick_tile(K, 512, 128)
    grid = (M // tm, K // tk)
    return pl.pallas_call(
        functools.partial(_matmul_bias_res_ln_kernel, eps=eps),
        out_shape=jax.ShapeDtypeStruct((M, N), out_dtype),
        grid_spec=pltpu.PrefetchScalarGridSpec(
            num_scalar_prefetch=0,
            grid=grid,
            in_specs=[
                pl.BlockSpec((tm, tk), lambda i, k: (i, k)),
                pl.BlockSpec((tk, N), lambda i, k: (k, 0)),
                pl.BlockSpec((1, N), lambda i, k: (0, 0)),
                pl.BlockSpec((tm, N), lambda i, k: (i, 0)),
                pl.BlockSpec((1, N), lambda i, k: (0, 0)),
                pl.BlockSpec((1, N), lambda i, k: (0, 0)),
            ],
            out_specs=pl.BlockSpec((tm, N), lambda i, k: (i, 0)),
            scratch_shapes=[pltpu.VMEM((tm, N), jnp.float32)],
        ),
        compiler_params=pltpu.CompilerParams(
            dimension_semantics=("parallel", "arbitrary"),
            vmem_limit_bytes=VMEM_LIMIT,
        ),
    )(x, w, b.reshape(1, N), res, gamma.reshape(1, N), beta.reshape(1, N))


# ----------------------------------------------------------------------------
# Kernel 3: row-tiled add + LayerNorm (embeddings)
# ----------------------------------------------------------------------------
def _add_ln_kernel(a_ref, b_ref, g_ref, beta_ref, o_ref, *, eps):
    h = a_ref[...].astype(jnp.float32) + b_ref[...].astype(jnp.float32)
    mu = jnp.mean(h, axis=-1, keepdims=True)
    d = h - mu
    var = jnp.mean(d * d, axis=-1, keepdims=True)
    normed = d * jax.lax.rsqrt(var + eps)
    o_ref[...] = (normed * g_ref[...] + beta_ref[...]).astype(o_ref.dtype)


def add_layernorm(a, b, gamma, beta, eps=1e-12, out_dtype=jnp.bfloat16):
    M, H = a.shape
    tm = _pick_tile(M, 512, 8)
    grid = (M // tm,)
    return pl.pallas_call(
        functools.partial(_add_ln_kernel, eps=eps),
        out_shape=jax.ShapeDtypeStruct((M, H), out_dtype),
        grid_spec=pltpu.PrefetchScalarGridSpec(
            num_scalar_prefetch=0,
            grid=grid,
            in_specs=[
                pl.BlockSpec((tm, H), lambda i: (i, 0)),
                pl.BlockSpec((tm, H), lambda i: (i, 0)),
                pl.BlockSpec((1, H), lambda i: (0, 0)),
                pl.BlockSpec((1, H), lambda i: (0, 0)),
            ],
            out_specs=pl.BlockSpec((tm, H), lambda i: (i, 0)),
        ),
        compiler_params=pltpu.CompilerParams(
            dimension_semantics=("parallel",),
            vmem_limit_bytes=VMEM_LIMIT,
        ),
    )(a, b, gamma.reshape(1, H), beta.reshape(1, H))


# ----------------------------------------------------------------------------
# Kernel 4: flash-style attention with online softmax
# ----------------------------------------------------------------------------
def _flash_attn_kernel(q_ref, k_ref, v_ref, o_ref, m_sc, l_sc, acc_sc, *, scale):
    ki = pl.program_id(2)

    @pl.when(ki == 0)
    def _():
        m_sc[...] = jnp.full_like(m_sc, -jnp.inf)
        l_sc[...] = jnp.zeros_like(l_sc)
        acc_sc[...] = jnp.zeros_like(acc_sc)

    q = q_ref[0]  # (tq, Dh) bf16
    k = k_ref[0]  # (tkv, Dh) bf16
    v = v_ref[0]  # (tkv, Dh) bf16

    s = (
        jax.lax.dot_general(
            q, k, (((1,), (1,)), ((), ())), preferred_element_type=jnp.float32
        )
        * scale
    )  # (tq, tkv) f32

    m_prev = m_sc[...]
    m_new = jnp.maximum(m_prev, jnp.max(s, axis=-1, keepdims=True))
    alpha = jnp.exp(m_prev - m_new)
    p = jnp.exp(s - m_new)
    l_sc[...] = alpha * l_sc[...] + jnp.sum(p, axis=-1, keepdims=True)
    acc_sc[...] = alpha * acc_sc[...] + jnp.dot(
        p.astype(v.dtype), v, preferred_element_type=jnp.float32
    )
    m_sc[...] = m_new

    @pl.when(ki == pl.num_programs(2) - 1)
    def _():
        inv_l = pl.reciprocal(l_sc[...], approx=True)
        o_ref[0] = (acc_sc[...] * inv_l).astype(o_ref.dtype)


def flash_attention(q, k, v, scale):
    """q,k,v: (B*nH, S, Dh) bf16 -> (B*nH, S, Dh) bf16."""
    BH, S, Dh = q.shape
    tq = _pick_tile(S, 256, 8)
    tkv = _pick_tile(S, 256, 8)
    grid = (BH, S // tq, S // tkv)
    return pl.pallas_call(
        functools.partial(_flash_attn_kernel, scale=scale),
        out_shape=jax.ShapeDtypeStruct((BH, S, Dh), jnp.bfloat16),
        grid_spec=pltpu.PrefetchScalarGridSpec(
            num_scalar_prefetch=0,
            grid=grid,
            in_specs=[
                pl.BlockSpec((1, tq, Dh), lambda b, qi, ki: (b, qi, 0)),
                pl.BlockSpec((1, tkv, Dh), lambda b, qi, ki: (b, ki, 0)),
                pl.BlockSpec((1, tkv, Dh), lambda b, qi, ki: (b, ki, 0)),
            ],
            out_specs=pl.BlockSpec((1, tq, Dh), lambda b, qi, ki: (b, qi, 0)),
            scratch_shapes=[
                pltpu.VMEM((tq, 1), jnp.float32),   # running max
                pltpu.VMEM((tq, 1), jnp.float32),   # running denom
                pltpu.VMEM((tq, Dh), jnp.float32),  # running numerator
            ],
        ),
        compiler_params=pltpu.CompilerParams(
            dimension_semantics=("parallel", "parallel", "arbitrary"),
            vmem_limit_bytes=VMEM_LIMIT,
        ),
    )(q, k, v)


# ----------------------------------------------------------------------------
# Model (small synthetic "bert-base-uncased"-shaped config)
# ----------------------------------------------------------------------------
CFG = dict(
    vocab_size=100,
    hidden=32,
    num_layers=2,
    num_heads=4,
    intermediate=64,
    max_pos=64,
    type_vocab=2,
    feature_len=16,
)


def init_params(key, cfg):
    H, I = cfg["hidden"], cfg["intermediate"]
    std = 0.02
    keys = iter(jax.random.split(key, 64))

    def nrm(shape, dtype=jnp.float32):
        return (std * jax.random.normal(next(keys), shape)).astype(dtype)

    p = {
        "word_emb": nrm((cfg["vocab_size"], H)),
        "pos_emb": nrm((cfg["max_pos"], H)),
        "type_emb": nrm((cfg["type_vocab"], H)),
        "emb_ln_g": jnp.ones((H,), jnp.float32),
        "emb_ln_b": jnp.zeros((H,), jnp.float32),
        "layers": [],
        # matmul weights stored bf16 (MXU operands); biases / LN params f32.
        "fc_w": nrm((H, cfg["feature_len"]), jnp.bfloat16),
        "fc_b": jnp.zeros((cfg["feature_len"],), jnp.float32),
    }
    for _ in range(cfg["num_layers"]):
        p["layers"].append(
            {
                # Fused Q/K/V projection: (H, 3H) weight, (3H,) bias.
                "w_qkv": nrm((H, 3 * H), jnp.bfloat16),
                "b_qkv": jnp.zeros((3 * H,), jnp.float32),
                "wo": nrm((H, H), jnp.bfloat16),
                "bo": jnp.zeros((H,), jnp.float32),
                "attn_ln_g": jnp.ones((H,), jnp.float32),
                "attn_ln_b": jnp.zeros((H,), jnp.float32),
                "w1": nrm((H, I), jnp.bfloat16),
                "b1": jnp.zeros((I,), jnp.float32),
                "w2": nrm((I, H), jnp.bfloat16),
                "b2": jnp.zeros((H,), jnp.float32),
                "ffn_ln_g": jnp.ones((H,), jnp.float32),
                "ffn_ln_b": jnp.zeros((H,), jnp.float32),
            }
        )
    return p


def bert_feature_forward(params, token_ids, cfg):
    B, S = token_ids.shape
    H = cfg["hidden"]
    nH = cfg["num_heads"]
    Dh = H // nH

    # ---- embeddings (gather/broadcast is glue; sum + LN fused in kernel) ----
    # TODO(synk): no attention_mask / token_type_ids — single full-length segment assumed.
    word = jnp.take(params["word_emb"], token_ids, axis=0)            # (B,S,H) f32
    pos = params["pos_emb"][:S][None, :, :]                           # (1,S,H)
    typ = params["type_emb"][0][None, None, :]                        # (1,1,H)
    emb_a = (word + pos).reshape(B * S, H)
    emb_b = jnp.broadcast_to(typ, (B, S, H)).reshape(B * S, H)
    x = add_layernorm(emb_a, emb_b, params["emb_ln_g"], params["emb_ln_b"])  # (B*S,H) bf16

    scale = 1.0 / (Dh ** 0.5)

    def split_heads(t):  # (B*S,H) -> (B*nH, S, Dh)
        return t.reshape(B, S, nH, Dh).transpose(0, 2, 1, 3).reshape(B * nH, S, Dh)

    for lp in params["layers"]:
        # ---- self-attention (fused QKV projection, flash attention) ----
        qkv = linear(x, lp["w_qkv"], lp["b_qkv"])                     # (B*S, 3H) bf16
        q, k, v = jnp.split(qkv, 3, axis=-1)
        # TODO(synk): head split/merge transposes kept in JAX; folding them into
        # attention BlockSpec index_maps would break the (8,128) block rule at Dh<128.
        ctx = flash_attention(split_heads(q), split_heads(k), split_heads(v), scale)
        ctx = ctx.reshape(B, nH, S, Dh).transpose(0, 2, 1, 3).reshape(B * S, H)
        # output proj + bias + residual + LayerNorm, fused in one kernel
        x = linear_res_ln(ctx, lp["wo"], lp["bo"], x, lp["attn_ln_g"], lp["attn_ln_b"])

        # ---- feed-forward ----
        h = linear(x, lp["w1"], lp["b1"], activation="gelu")
        x = linear_res_ln(h, lp["w2"], lp["b2"], x, lp["ffn_ln_g"], lp["ffn_ln_b"])

    last_hidden = x.reshape(B, S, H)
    cls = last_hidden[:, 0, :]                                        # (B,H) bf16

    # final projection: pad N up to a lane-dense 128 multiple, slice outside.
    fc_w, fc_b = params["fc_w"], params["fc_b"]
    F = fc_w.shape[1]
    pad = (-F) % 128
    if pad:
        fc_w = jnp.pad(fc_w, ((0, 0), (0, pad)))
        fc_b = jnp.pad(fc_b, (0, pad))
    feat = linear(cls, fc_w, fc_b, out_dtype=jnp.float32)[:, :F]      # (B,F) f32
    return feat


# ----------------------------------------------------------------------------
if __name__ == "__main__":
    key = jax.random.PRNGKey(0)
    pkey, dkey = jax.random.split(key)

    params = init_params(pkey, CFG)

    B, S = 2, 8
    token_ids = jax.random.randint(dkey, (B, S), 0, CFG["vocab_size"], dtype=jnp.int32)

    out = jax.jit(lambda ids: bert_feature_forward(params, ids, CFG))(token_ids)
    out = jax.block_until_ready(out)

    assert out.shape == (B, CFG["feature_len"])
    assert out.dtype == jnp.float32
    print("KERNEL_OK")
</pallas_src>

<mosaic_0001>
module attributes {stable_mosaic.version = 11 : i64} {
  func.func @_add_ln_kernel(%arg0: i32, %arg1: memref<16x32xf32, #tpu.memory_space<vmem>>, %arg2: memref<16x32xf32, #tpu.memory_space<vmem>>, %arg3: memref<1x32xf32, #tpu.memory_space<vmem>>, %arg4: memref<1x32xf32, #tpu.memory_space<vmem>>, %arg5: memref<16x32xbf16, #tpu.memory_space<vmem>>) attributes {dimension_semantics = [#tpu.dimension_semantics<parallel>], iteration_bounds = array<i64: 1>, scalar_prefetch = 0 : i64, scratch_operands = 0 : i64, tpu.core_type = #tpu.core_type<tc>, window_params = [{transform_indices = @transform_0, window_bounds = array<i64: 16, 32>}, {transform_indices = @transform_1, window_bounds = array<i64: 16, 32>}, {pipeline_mode = #tpu.pipeline_mode<synchronous>, transform_indices = @transform_2, window_bounds = array<i64: 1, 32>}, {pipeline_mode = #tpu.pipeline_mode<synchronous>, transform_indices = @transform_3, window_bounds = array<i64: 1, 32>}, {transform_indices = @transform_4, window_bounds = array<i64: 16, 32>}]} {
    %c0 = arith.constant 0 : index
    %c0_0 = arith.constant 0 : index
    %0 = vector.load %arg1[%c0, %c0_0] : memref<16x32xf32, #tpu.memory_space<vmem>>, vector<16x32xf32>
    %c0_1 = arith.constant 0 : index
    %c0_2 = arith.constant 0 : index
    %1 = vector.load %arg2[%c0_1, %c0_2] : memref<16x32xf32, #tpu.memory_space<vmem>>, vector<16x32xf32>
    %2 = arith.addf %0, %1 : vector<16x32xf32>
    %cst = arith.constant dense<0.000000e+00> : vector<16xf32>
    %3 = vector.multi_reduction <add>, %2, %cst [1] : vector<16x32xf32> to vector<16xf32>
    %4 = vector.shape_cast %3 : vector<16xf32> to vector<16x1xf32>
    %cst_3 = arith.constant 3.200000e+01 : f32
    %5 = vector.broadcast %cst_3 : f32 to vector<16x1xf32>
    %6 = arith.divf %4, %5 : vector<16x1xf32>
    %7 = vector.broadcast %6 : vector<16x1xf32> to vector<16x32xf32>
    %8 = arith.subf %2, %7 : vector<16x32xf32>
    %9 = arith.mulf %8, %8 : vector<16x32xf32>
    %cst_4 = arith.constant dense<0.000000e+00> : vector<16xf32>
    %10 = vector.multi_reduction <add>, %9, %cst_4 [1] : vector<16x32xf32> to vector<16xf32>
    %11 = vector.shape_cast %10 : vector<16xf32> to vector<16x1xf32>
    %cst_5 = arith.constant 3.200000e+01 : f32
    %12 = vector.broadcast %cst_5 : f32 to vector<16x1xf32>
    %13 = arith.divf %11, %12 : vector<16x1xf32>
    %cst_6 = arith.constant 9.99999996E-13 : f32
    %14 = vector.broadcast %cst_6 : f32 to vector<16x1xf32>
    %15 = arith.addf %13, %14 : vector<16x1xf32>
    %16 = math.rsqrt %15 : vector<16x1xf32>
    %17 = vector.broadcast %16 : vector<16x1xf32> to vector<16x32xf32>
    %18 = arith.mulf %8, %17 : vector<16x32xf32>
    %c0_7 = arith.constant 0 : index
    %c0_8 = arith.constant 0 : index
    %19 = vector.load %arg3[%c0_7, %c0_8] : memref<1x32xf32, #tpu.memory_space<vmem>>, vector<1x32xf32>
    %20 = vector.broadcast %19 : vector<1x32xf32> to vector<16x32xf32>
    %21 = arith.mulf %18, %20 : vector<16x32xf32>
    %c0_9 = arith.constant 0 : index
    %c0_10 = arith.constant 0 : index
    %22 = vector.load %arg4[%c0_9, %c0_10] : memref<1x32xf32, #tpu.memory_space<vmem>>, vector<1x32xf32>
    %23 = vector.broadcast %22 : vector<1x32xf32> to vector<16x32xf32>
    %24 = arith.addf %21, %23 : vector<16x32xf32>
    %25 = arith.truncf %24 : vector<16x32xf32> to vector<16x32xbf16>
    %c0_11 = arith.constant 0 : index
    %c0_12 = arith.constant 0 : index
    %26 = vector.load %arg5[%c0_11, %c0_12] : memref<16x32xbf16, #tpu.memory_space<vmem>>, vector<16x32xbf16>
    tpu.vector_store %arg5[%c0_11, %c0_12], %25 {strides = array<i32>} : memref<16x32xbf16, #tpu.memory_space<vmem>>, vector<16x32xbf16>,
    return
  }
  func.func @transform_0(%arg0: i32) -> (i32, i32) {
    %c0_i32 = arith.constant 0 : i32
    %c0_i32_0 = arith.constant 0 : i32
    return %arg0, %c0_i32 : i32, i32
  }
  func.func @transform_1(%arg0: i32) -> (i32, i32) {
    %c0_i32 = arith.constant 0 : i32
    %c0_i32_0 = arith.constant 0 : i32
    return %arg0, %c0_i32 : i32, i32
  }
  func.func @transform_2(%arg0: i32) -> (i32, i32) {
    %c0_i32 = arith.constant 0 : i32
    %c0_i32_0 = arith.constant 0 : i32
    %c0_i32_1 = arith.constant 0 : i32
    return %c0_i32, %c0_i32_0 : i32, i32
  }
  func.func @transform_3(%arg0: i32) -> (i32, i32) {
    %c0_i32 = arith.constant 0 : i32
    %c0_i32_0 = arith.constant 0 : i32
    %c0_i32_1 = arith.constant 0 : i32
    return %c0_i32, %c0_i32_0 : i32, i32
  }
  func.func @transform_4(%arg0: i32) -> (i32, i32) {
    %c0_i32 = arith.constant 0 : i32
    %c0_i32_0 = arith.constant 0 : i32
    return %arg0, %c0_i32 : i32, i32
  }
}

module attributes {stable_mosaic.version = 11 : i64} {
  func.func @_matmul_bias_kernel(%arg0: i32, %arg1: i32, %arg2: i32, %arg3: memref<16x32xbf16, #tpu.memory_space<vmem>>, %arg4: memref<32x96xbf16, #tpu.memory_space<vmem>>, %arg5: memref<1x96xf32, #tpu.memory_space<vmem>>, %arg6: memref<16x96xbf16, #tpu.memory_space<vmem>>, %arg7: memref<16x96xf32, #tpu.memory_space<vmem>>) attributes {dimension_semantics = [#tpu.dimension_semantics<parallel>, #tpu.dimension_semantics<parallel>, #tpu.dimension_semantics<arbitrary>], iteration_bounds = array<i64: 1, 1, 1>, scalar_prefetch = 0 : i64, scratch_operands = 1 : i64, tpu.core_type = #tpu.core_type<tc>, window_params = [{transform_indices = @transform_0, window_bounds = array<i64: 16, 32>}, {transform_indices = @transform_1, window_bounds = array<i64: 32, 96>}, {transform_indices = @transform_2, window_bounds = array<i64: 1, 96>}, {transform_indices = @transform_3, window_bounds = array<i64: 16, 96>}]} {
    %c0_i32 = arith.constant 0 : i32
    %0 = arith.cmpi eq, %arg2, %c0_i32 : i32
    %1 = arith.extui %0 : i1 to i32
    %c0_i32_0 = arith.constant 0 : i32
    %2 = arith.cmpi ne, %1, %c0_i32_0 : i32
    scf.if %2 {
      %cst_10 = arith.constant 0.000000e+00 : f32
      %12 = vector.broadcast %cst_10 : f32 to vector<16x96xf32>
      %c0_11 = arith.constant 0 : index
      %c0_12 = arith.constant 0 : index
      %13 = vector.load %arg7[%c0_11, %c0_12] : memref<16x96xf32, #tpu.memory_space<vmem>>, vector<16x96xf32>
      tpu.vector_store %arg7[%c0_11, %c0_12], %12 {strides = array<i32>} : memref<16x96xf32, #tpu.memory_space<vmem>>, vector<16x96xf32>,
    } else {
    }
    %c0 = arith.constant 0 : index
    %c0_1 = arith.constant 0 : index
    %3 = vector.load %arg7[%c0, %c0_1] : memref<16x96xf32, #tpu.memory_space<vmem>>, vector<16x96xf32>
    %c0_2 = arith.constant 0 : index
    %c0_3 = arith.constant 0 : index
    %4 = vector.load %arg3[%c0_2, %c0_3] : memref<16x32xbf16, #tpu.memory_space<vmem>>, vector<16x32xbf16>
    %c0_4 = arith.constant 0 : index
    %c0_5 = arith.constant 0 : index
    %5 = vector.load %arg4[%c0_4, %c0_5] : memref<32x96xbf16, #tpu.memory_space<vmem>>, vector<32x96xbf16>
    %cst = arith.constant dense<0.000000e+00> : vector<16x96xf32>
    %6 = tpu.matmul %4, %5, %cst {dimension_numbers = #tpu.dot_dimension_numbers<[1], [0], [0], [1], [0, 0, 1, 1], [], []>} : vector<16x32xbf16>, vector<32x96xbf16>, vector<16x96xf32> -> vector<16x96xf32>
    %7 = arith.addf %3, %6 : vector<16x96xf32>
    %c0_6 = arith.constant 0 : index
    %c0_7 = arith.constant 0 : index
    %8 = vector.load %arg7[%c0_6, %c0_7] : memref<16x96xf32, #tpu.memory_space<vmem>>, vector<16x96xf32>
    tpu.vector_store %arg7[%c0_6, %c0_7], %7 {strides = array<i32>} : memref<16x96xf32, #tpu.memory_space<vmem>>, vector<16x96xf32>,
    %c0_i32_8 = arith.constant 0 : i32
    %9 = arith.cmpi eq, %arg2, %c0_i32_8 : i32
    %10 = arith.extui %9 : i1 to i32
    %c0_i32_9 = arith.constant 0 : i32
    %11 = arith.cmpi ne, %10, %c0_i32_9 : i32
    scf.if %11 {
      %c0_10 = arith.constant 0 : index
      %c0_11 = arith.constant 0 : index
      %12 = vector.load %arg7[%c0_10, %c0_11] : memref<16x96xf32, #tpu.memory_space<vmem>>, vector<16x96xf32>
      %c0_12 = arith.constant 0 : index
      %c0_13 = arith.constant 0 : index
      %13 = vector.load %arg5[%c0_12, %c0_13] : memref<1x96xf32, #tpu.memory_space<vmem>>, vector<1x96xf32>
      %14 = vector.broadcast %13 : vector<1x96xf32> to vector<16x96xf32>
      %15 = arith.addf %12, %14 : vector<16x96xf32>
      %16 = arith.truncf %15 : vector<16x96xf32> to vector<16x96xbf16>
      %c0_14 = arith.constant 0 : index
      %c0_15 = arith.constant 0 : index
      %17 = vector.load %arg6[%c0_14, %c0_15] : memref<16x96xbf16, #tpu.memory_space<vmem>>, vector<16x96xbf16>
      tpu.vector_store %arg6[%c0_14, %c0_15], %16 {strides = array<i32>} : memref<16x96xbf16, #tpu.memory_space<vmem>>, vector<16x96xbf16>,
    } else {
    }
    return
  }
  func.func @transform_0(%arg0: i32, %arg1: i32, %arg2: i32) -> (i32, i32) {
    %c0_i32 = arith.constant 0 : i32
    return %arg0, %arg2 : i32, i32
  }
  func.func @transform_1(%arg0: i32, %arg1: i32, %arg2: i32) -> (i32, i32) {
    %c0_i32 = arith.constant 0 : i32
    return %arg2, %arg1 : i32, i32
  }
  func.func @transform_2(%arg0: i32, %arg1: i32, %arg2: i32) -> (i32, i32) {
    %c0_i32 = arith.constant 0 : i32
    %c0_i32_0 = arith.constant 0 : i32
    return %c0_i32, %arg1 : i32, i32
  }
  func.func @transform_3(%arg0: i32, %arg1: i32, %arg2: i32) -> (i32, i32) {
    %c0_i32 = arith.constant 0 : i32
    return %arg0, %arg1 : i32, i32
  }
}

module attributes {stable_mosaic.version = 11 : i64} {
  func.func @_flash_attn_kernel(%arg0: i32, %arg1: i32, %arg2: i32, %arg3: memref<1x8x8xbf16, #tpu.memory_space<vmem>>, %arg4: memref<1x8x8xbf16, #tpu.memory_space<vmem>>, %arg5: memref<1x8x8xbf16, #tpu.memory_space<vmem>>, %arg6: memref<1x8x8xbf16, #tpu.memory_space<vmem>>, %arg7: memref<8x1xf32, #tpu.memory_space<vmem>>, %arg8: memref<8x1xf32, #tpu.memory_space<vmem>>, %arg9: memref<8x8xf32, #tpu.memory_space<vmem>>) attributes {dimension_semantics = [#tpu.dimension_semantics<parallel>, #tpu.dimension_semantics<parallel>, #tpu.dimension_semantics<arbitrary>], iteration_bounds = array<i64: 8, 1, 1>, scalar_prefetch = 0 : i64, scratch_operands = 3 : i64, tpu.core_type = #tpu.core_type<tc>, window_params = [{transform_indices = @transform_0, window_bounds = array<i64: 1, 8, 8>}, {transform_indices = @transform_1, window_bounds = array<i64: 1, 8, 8>}, {transform_indices = @transform_2, window_bounds = array<i64: 1, 8, 8>}, {transform_indices = @transform_3, window_bounds = array<i64: 1, 8, 8>}]} {
    %c0_i32 = arith.constant 0 : i32
    %0 = arith.cmpi eq, %arg2, %c0_i32 : i32
    %1 = arith.extui %0 : i1 to i32
    %c0_i32_0 = arith.constant 0 : i32
    %2 = arith.cmpi ne, %1, %c0_i32_0 : i32
    scf.if %2 {
      %cst_27 = arith.constant 0xFF800000 : f32
      %38 = vector.broadcast %cst_27 : f32 to vector<8x1xf32>
      %c0_28 = arith.constant 0 : index
      %c0_29 = arith.constant 0 : index
      %39 = vector.load %arg7[%c0_28, %c0_29] : memref<8x1xf32, #tpu.memory_space<vmem>>, vector<8x1xf32>
      tpu.vector_store %arg7[%c0_28, %c0_29], %38 {strides = array<i32>} : memref<8x1xf32, #tpu.memory_space<vmem>>, vector<8x1xf32>,
      %cst_30 = arith.constant 0.000000e+00 : f32
      %40 = vector.broadcast %cst_30 : f32 to vector<8x1xf32>
      %c0_31 = arith.constant 0 : index
      %c0_32 = arith.constant 0 : index
      %41 = vector.load %arg8[%c0_31, %c0_32] : memref<8x1xf32, #tpu.memory_space<vmem>>, vector<8x1xf32>
      tpu.vector_store %arg8[%c0_31, %c0_32], %40 {strides = array<i32>} : memref<8x1xf32, #tpu.memory_space<vmem>>, vector<8x1xf32>,
      %cst_33 = arith.constant 0.000000e+00 : f32
      %42 = vector.broadcast %cst_33 : f32 to vector<8x8xf32>
      %c0_34 = arith.constant 0 : index
      %c0_35 = arith.constant 0 : index
      %43 = vector.load %arg9[%c0_34, %c0_35] : memref<8x8xf32, #tpu.memory_space<vmem>>, vector<8x8xf32>
      tpu.vector_store %arg9[%c0_34, %c0_35], %42 {strides = array<i32>} : memref<8x8xf32, #tpu.memory_space<vmem>>, vector<8x8xf32>,
    } else {
    }
    %c0 = arith.constant 0 : index
    %c0_1 = arith.constant 0 : index
    %c0_2 = arith.constant 0 : index
    %3 = vector.load %arg3[%c0, %c0_1, %c0_2] : memref<1x8x8xbf16, #tpu.memory_space<vmem>>, vector<1x8x8xbf16>
    %4 = vector.shape_cast %3 : vector<1x8x8xbf16> to vector<8x8xbf16>
    %c0_3 = arith.constant 0 : index
    %c0_4 = arith.constant 0 : index
    %c0_5 = arith.constant 0 : index
    %5 = vector.load %arg4[%c0_3, %c0_4, %c0_5] : memref<1x8x8xbf16, #tpu.memory_space<vmem>>, vector<1x8x8xbf16>
    %6 = vector.shape_cast %5 : vector<1x8x8xbf16> to vector<8x8xbf16>
    %c0_6 = arith.constant 0 : index
    %c0_7 = arith.constant 0 : index
    %c0_8 = arith.constant 0 : index
    %7 = vector.load %arg5[%c0_6, %c0_7, %c0_8] : memref<1x8x8xbf16, #tpu.memory_space<vmem>>, vector<1x8x8xbf16>
    %8 = vector.shape_cast %7 : vector<1x8x8xbf16> to vector<8x8xbf16>
    %cst = arith.constant dense<0.000000e+00> : vector<8x8xf32>
    %9 = tpu.matmul %4, %6, %cst {dimension_numbers = #tpu.dot_dimension_numbers<[1], [1], [0], [0], [0, 0, 1, 0], [], []>} : vector<8x8xbf16>, vector<8x8xbf16>, vector<8x8xf32> -> vector<8x8xf32>
    %cst_9 = arith.constant 0.353553385 : f32
    %10 = vector.broadcast %cst_9 : f32 to vector<8x8xf32>
    %11 = arith.mulf %9, %10 : vector<8x8xf32>
    %c0_10 = arith.constant 0 : index
    %c0_11 = arith.constant 0 : index
    %12 = vector.load %arg7[%c0_10, %c0_11] : memref<8x1xf32, #tpu.memory_space<vmem>>, vector<8x1xf32>
    %cst_12 = arith.constant dense<0xFF800000> : vector<8xf32>
    %13 = vector.multi_reduction <maximumf>, %11, %cst_12 [1] : vector<8x8xf32> to vector<8xf32>
    %14 = vector.shape_cast %13 : vector<8xf32> to vector<8x1xf32>
    %15 = arith.maximumf %12, %14 : vector<8x1xf32>
    %16 = arith.subf %12, %15 : vector<8x1xf32>
    %17 = math.exp %16 : vector<8x1xf32>
    %18 = vector.broadcast %15 : vector<8x1xf32> to vector<8x8xf32>
    %19 = arith.subf %11, %18 : vector<8x8xf32>
    %20 = math.exp %19 : vector<8x8xf32>
    %c0_13 = arith.constant 0 : index
    %c0_14 = arith.constant 0 : index
    %21 = vector.load %arg8[%c0_13, %c0_14] : memref<8x1xf32, #tpu.memory_space<vmem>>, vector<8x1xf32>
    %22 = arith.mulf %17, %21 : vector<8x1xf32>
    %cst_15 = arith.constant dense<0.000000e+00> : vector<8xf32>
    %23 = vector.multi_reduction <add>, %20, %cst_15 [1] : vector<8x8xf32> to vector<8xf32>
    %24 = vector.shape_cast %23 : vector<8xf32> to vector<8x1xf32>
    %25 = arith.addf %22, %24 : vector<8x1xf32>
    %c0_16 = arith.constant 0 : index
    %c0_17 = arith.constant 0 : index
    %26 = vector.load %arg8[%c0_16, %c0_17] : memref<8x1xf32, #tpu.memory_space<vmem>>, vector<8x1xf32>
    tpu.vector_store %arg8[%c0_16, %c0_17], %25 {strides = array<i32>} : memref<8x1xf32, #tpu.memory_space<vmem>>, vector<8x1xf32>,
    %c0_18 = arith.constant 0 : index
    %c0_19 = arith.constant 0 : index
    %27 = vector.load %arg9[%c0_18, %c0_19] : memref<8x8xf32, #tpu.memory_space<vmem>>, vector<8x8xf32>
    %28 = vector.broadcast %17 : vector<8x1xf32> to vector<8x8xf32>
    %29 = arith.mulf %28, %27 : vector<8x8xf32>
    %30 = arith.truncf %20 : vector<8x8xf32> to vector<8x8xbf16>
    %cst_20 = arith.constant dense<0.000000e+00> : vector<8x8xf32>
    %31 = tpu.matmul %30, %8, %cst_20 {dimension_numbers = #tpu.dot_dimension_numbers<[1], [0], [0], [1], [0, 0, 1, 1], [], []>} : vector<8x8xbf16>, vector<8x8xbf16>, vector<8x8xf32> -> vector<8x8xf32>
    %32 = arith.addf %29, %31 : vector<8x8xf32>
    %c0_21 = arith.constant 0 : index
    %c0_22 = arith.constant 0 : index
    %33 = vector.load %arg9[%c0_21, %c0_22] : memref<8x8xf32, #tpu.memory_space<vmem>>, vector<8x8xf32>
    tpu.vector_store %arg9[%c0_21, %c0_22], %32 {strides = array<i32>} : memref<8x8xf32, #tpu.memory_space<vmem>>, vector<8x8xf32>,
    %c0_23 = arith.constant 0 : index
    %c0_24 = arith.constant 0 : index
    %34 = vector.load %arg7[%c0_23, %c0_24] : memref<8x1xf32, #tpu.memory_space<vmem>>, vector<8x1xf32>
    tpu.vector_store %arg7[%c0_23, %c0_24], %15 {strides = array<i32>} : memref<8x1xf32, #tpu.memory_space<vmem>>, vector<8x1xf32>,
    %c0_i32_25 = arith.constant 0 : i32
    %35 = arith.cmpi eq, %arg2, %c0_i32_25 : i32
    %36 = arith.extui %35 : i1 to i32
    %c0_i32_26 = arith.constant 0 : i32
    %37 = arith.cmpi ne, %36, %c0_i32_26 : i32
    scf.if %37 {
      %c0_27 = arith.constant 0 : index
      %c0_28 = arith.constant 0 : index
      %38 = vector.load %arg8[%c0_27, %c0_28] : memref<8x1xf32, #tpu.memory_space<vmem>>, vector<8x1xf32>
      %39 = tpu.reciprocal %38 {approx = true} : vector<8x1xf32> -> vector<8x1xf32>
      %c0_29 = arith.constant 0 : index
      %c0_30 = arith.constant 0 : index
      %40 = vector.load %arg9[%c0_29, %c0_30] : memref<8x8xf32, #tpu.memory_space<vmem>>, vector<8x8xf32>
      %41 = vector.broadcast %39 : vector<8x1xf32> to vector<8x8xf32>
      %42 = arith.mulf %40, %41 : vector<8x8xf32>
      %43 = arith.truncf %42 : vector<8x8xf32> to vector<8x8xbf16>
      %c0_31 = arith.constant 0 : index
      %c0_32 = arith.constant 0 : index
      %c0_33 = arith.constant 0 : index
      %44 = vector.load %arg6[%c0_31, %c0_32, %c0_33] : memref<1x8x8xbf16, #tpu.memory_space<vmem>>, vector<1x8x8xbf16>
      %45 = vector.shape_cast %44 : vector<1x8x8xbf16> to vector<8x8xbf16>
      %46 = vector.shape_cast %43 : vector<8x8xbf16> to vector<1x8x8xbf16>
      tpu.vector_store %arg6[%c0_31, %c0_32, %c0_33], %46 {strides = array<i32>} : memref<1x8x8xbf16, #tpu.memory_space<vmem>>, vector<1x8x8xbf16>,
    } else {
    }
    return
  }
  func.func @transform_0(%arg0: i32, %arg1: i32, %arg2: i32) -> (i32, i32, i32) {
    %c0_i32 = arith.constant 0 : i32
    %c0_i32_0 = arith.constant 0 : i32
    return %arg0, %arg1, %c0_i32 : i32, i32, i32
  }
  func.func @transform_1(%arg0: i32, %arg1: i32, %arg2: i32) -> (i32, i32, i32) {
    %c0_i32 = arith.constant 0 : i32
    %c0_i32_0 = arith.constant 0 : i32
    return %arg0, %arg2, %c0_i32 : i32, i32, i32
  }
  func.func @transform_2(%arg0: i32, %arg1: i32, %arg2: i32) -> (i32, i32, i32) {
    %c0_i32 = arith.constant 0 : i32
    %c0_i32_0 = arith.constant 0 : i32
    return %arg0, %arg2, %c0_i32 : i32, i32, i32
  }
  func.func @transform_3(%arg0: i32, %arg1: i32, %arg2: i32) -> (i32, i32, i32) {
    %c0_i32 = arith.constant 0 : i32
    %c0_i32_0 = arith.constant 0 : i32
    return %arg0, %arg1, %c0_i32 : i32, i32, i32
  }
}

module attributes {stable_mosaic.version = 11 : i64} {
  func.func @_matmul_bias_res_ln_kernel(%arg0: i32, %arg1: i32, %arg2: memref<16x32xbf16, #tpu.memory_space<vmem>>, %arg3: memref<32x32xbf16, #tpu.memory_space<vmem>>, %arg4: memref<1x32xf32, #tpu.memory_space<vmem>>, %arg5: memref<16x32xbf16, #tpu.memory_space<vmem>>, %arg6: memref<1x32xf32, #tpu.memory_space<vmem>>, %arg7: memref<1x32xf32, #tpu.memory_space<vmem>>, %arg8: memref<16x32xbf16, #tpu.memory_space<vmem>>, %arg9: memref<16x32xf32, #tpu.memory_space<vmem>>) attributes {dimension_semantics = [#tpu.dimension_semantics<parallel>, #tpu.dimension_semantics<arbitrary>], iteration_bounds = array<i64: 1, 1>, scalar_prefetch = 0 : i64, scratch_operands = 1 : i64, tpu.core_type = #tpu.core_type<tc>, window_params = [{transform_indices = @transform_0, window_bounds = array<i64: 16, 32>}, {transform_indices = @transform_1, window_bounds = array<i64: 32, 32>}, {pipeline_mode = #tpu.pipeline_mode<synchronous>, transform_indices = @transform_2, window_bounds = array<i64: 1, 32>}, {transform_indices = @transform_3, window_bounds = array<i64: 16, 32>}, {pipeline_mode = #tpu.pipeline_mode<synchronous>, transform_indices = @transform_4, window_bounds = array<i64: 1, 32>}, {pipeline_mode = #tpu.pipeline_mode<synchronous>, transform_indices = @transform_5, window_bounds = array<i64: 1, 32>}, {transform_indices = @transform_6, window_bounds = array<i64: 16, 32>}]} {
    %c0_i32 = arith.constant 0 : i32
    %0 = arith.cmpi eq, %arg1, %c0_i32 : i32
    %1 = arith.extui %0 : i1 to i32
    %c0_i32_0 = arith.constant 0 : i32
    %2 = arith.cmpi ne, %1, %c0_i32_0 : i32
    scf.if %2 {
      %cst_10 = arith.constant 0.000000e+00 : f32
      %12 = vector.broadcast %cst_10 : f32 to vector<16x32xf32>
      %c0_11 = arith.constant 0 : index
      %c0_12 = arith.constant 0 : index
      %13 = vector.load %arg9[%c0_11, %c0_12] : memref<16x32xf32, #tpu.memory_space<vmem>>, vector<16x32xf32>
      tpu.vector_store %arg9[%c0_11, %c0_12], %12 {strides = array<i32>} : memref<16x32xf32, #tpu.memory_space<vmem>>, vector<16x32xf32>,
    } else {
    }
    %c0 = arith.constant 0 : index
    %c0_1 = arith.constant 0 : index
    %3 = vector.load %arg9[%c0, %c0_1] : memref<16x32xf32, #tpu.memory_space<vmem>>, vector<16x32xf32>
    %c0_2 = arith.constant 0 : index
    %c0_3 = arith.constant 0 : index
    %4 = vector.load %arg2[%c0_2, %c0_3] : memref<16x32xbf16, #tpu.memory_space<vmem>>, vector<16x32xbf16>
    %c0_4 = arith.constant 0 : index
    %c0_5 = arith.constant 0 : index
    %5 = vector.load %arg3[%c0_4, %c0_5] : memref<32x32xbf16, #tpu.memory_space<vmem>>, vector<32x32xbf16>
    %cst = arith.constant dense<0.000000e+00> : vector<16x32xf32>
    %6 = tpu.matmul %4, %5, %cst {dimension_numbers = #tpu.dot_dimension_numbers<[1], [0], [0], [1], [0, 0, 1, 1], [], []>} : vector<16x32xbf16>, vector<32x32xbf16>, vector<16x32xf32> -> vector<16x32xf32>
    %7 = arith.addf %3, %6 : vector<16x32xf32>
    %c0_6 = arith.constant 0 : index
    %c0_7 = arith.constant 0 : index
    %8 = vector.load %arg9[%c0_6, %c0_7] : memref<16x32xf32, #tpu.memory_space<vmem>>, vector<16x32xf32>
    tpu.vector_store %arg9[%c0_6, %c0_7], %7 {strides = array<i32>} : memref<16x32xf32, #tpu.memory_space<vmem>>, vector<16x32xf32>,
    %c0_i32_8 = arith.constant 0 : i32
    %9 = arith.cmpi eq, %arg1, %c0_i32_8 : i32
    %10 = arith.extui %9 : i1 to i32
    %c0_i32_9 = arith.constant 0 : i32
    %11 = arith.cmpi ne, %10, %c0_i32_9 : i32
    scf.if %11 {
      %c0_10 = arith.constant 0 : index
      %c0_11 = arith.constant 0 : index
      %12 = vector.load %arg9[%c0_10, %c0_11] : memref<16x32xf32, #tpu.memory_space<vmem>>, vector<16x32xf32>
      %c0_12 = arith.constant 0 : index
      %c0_13 = arith.constant 0 : index
      %13 = vector.load %arg4[%c0_12, %c0_13] : memref<1x32xf32, #tpu.memory_space<vmem>>, vector<1x32xf32>
      %14 = vector.broadcast %13 : vector<1x32xf32> to vector<16x32xf32>
      %15 = arith.addf %12, %14 : vector<16x32xf32>
      %c0_14 = arith.constant 0 : index
      %c0_15 = arith.constant 0 : index
      %16 = vector.load %arg5[%c0_14, %c0_15] : memref<16x32xbf16, #tpu.memory_space<vmem>>, vector<16x32xbf16>
      %17 = arith.extf %16 : vector<16x32xbf16> to vector<16x32xf32>
      %18 = arith.addf %15, %17 : vector<16x32xf32>
      %cst_16 = arith.constant dense<0.000000e+00> : vector<16xf32>
      %19 = vector.multi_reduction <add>, %18, %cst_16 [1] : vector<16x32xf32> to vector<16xf32>
      %20 = vector.shape_cast %19 : vector<16xf32> to vector<16x1xf32>
      %cst_17 = arith.constant 3.200000e+01 : f32
      %21 = vector.broadcast %cst_17 : f32 to vector<16x1xf32>
      %22 = arith.divf %20, %21 : vector<16x1xf32>
      %23 = vector.broadcast %22 : vector<16x1xf32> to vector<16x32xf32>
      %24 = arith.subf %18, %23 : vector<16x32xf32>
      %25 = arith.mulf %24, %24 : vector<16x32xf32>
      %cst_18 = arith.constant dense<0.000000e+00> : vector<16xf32>
      %26 = vector.multi_reduction <add>, %25, %cst_18 [1] : vector<16x32xf32> to vector<16xf32>
      %27 = vector.shape_cast %26 : vector<16xf32> to vector<16x1xf32>
      %cst_19 = arith.constant 3.200000e+01 : f32
      %28 = vector.broadcast %cst_19 : f32 to vector<16x1xf32>
      %29 = arith.divf %27, %28 : vector<16x1xf32>
      %cst_20 = arith.constant 9.99999996E-13 : f32
      %30 = vector.broadcast %cst_20 : f32 to vector<16x1xf32>
      %31 = arith.addf %29, %30 : vector<16x1xf32>
      %32 = math.rsqrt %31 : vector<16x1xf32>
      %33 = vector.broadcast %32 : vector<16x1xf32> to vector<16x32xf32>
      %34 = arith.mulf %24, %33 : vector<16x32xf32>
      %c0_21 = arith.constant 0 : index
      %c0_22 = arith.constant 0 : index
      %35 = vector.load %arg6[%c0_21, %c0_22] : memref<1x32xf32, #tpu.memory_space<vmem>>, vector<1x32xf32>
      %36 = vector.broadcast %35 : vector<1x32xf32> to vector<16x32xf32>
      %37 = arith.mulf %34, %36 : vector<16x32xf32>
      %c0_23 = arith.constant 0 : index
      %c0_24 = arith.constant 0 : index
      %38 = vector.load %arg7[%c0_23, %c0_24] : memref<1x32xf32, #tpu.memory_space<vmem>>, vector<1x32xf32>
      %39 = vector.broadcast %38 : vector<1x32xf32> to vector<16x32xf32>
      %40 = arith.addf %37, %39 : vector<16x32xf32>
      %41 = arith.truncf %40 : vector<16x32xf32> to vector<16x32xbf16>
      %c0_25 = arith.constant 0 : index
      %c0_26 = arith.constant 0 : index
      %42 = vector.load %arg8[%c0_25, %c0_26] : memref<16x32xbf16, #tpu.memory_space<vmem>>, vector<16x32xbf16>
      tpu.vector_store %arg8[%c0_25, %c0_26], %41 {strides = array<i32>} : memref<16x32xbf16, #tpu.memory_space<vmem>>, vector<16x32xbf16>,
    } else {
    }
    return
  }
  func.func @transform_0(%arg0: i32, %arg1: i32) -> (i32, i32) {
    %c0_i32 = arith.constant 0 : i32
    return %arg0, %arg1 : i32, i32
  }
  func.func @transform_1(%arg0: i32, %arg1: i32) -> (i32, i32) {
    %c0_i32 = arith.constant 0 : i32
    %c0_i32_0 = arith.constant 0 : i32
    return %arg1, %c0_i32 : i32, i32
  }
  func.func @transform_2(%arg0: i32, %arg1: i32) -> (i32, i32) {
    %c0_i32 = arith.constant 0 : i32
    %c0_i32_0 = arith.constant 0 : i32
    %c0_i32_1 = arith.constant 0 : i32
    return %c0_i32, %c0_i32_0 : i32, i32
  }
  func.func @transform_3(%arg0: i32, %arg1: i32) -> (i32, i32) {
    %c0_i32 = arith.constant 0 : i32
    %c0_i32_0 = arith.constant 0 : i32
    return %arg0, %c0_i32 : i32, i32
  }
  func.func @transform_4(%arg0: i32, %arg1: i32) -> (i32, i32) {
    %c0_i32 = arith.constant 0 : i32
    %c0_i32_0 = arith.constant 0 : i32
    %c0_i32_1 = arith.constant 0 : i32
    return %c0_i32, %c0_i32_0 : i32, i32
  }
  func.func @transform_5(%arg0: i32, %arg1: i32) -> (i32, i32) {
    %c0_i32 = arith.constant 0 : i32
    %c0_i32_0 = arith.constant 0 : i32
    %c0_i32_1 = arith.constant 0 : i32
    return %c0_i32, %c0_i32_0 : i32, i32
  }
  func.func @transform_6(%arg0: i32, %arg1: i32) -> (i32, i32) {
    %c0_i32 = arith.constant 0 : i32
    %c0_i32_0 = arith.constant 0 : i32
    return %arg0, %c0_i32 : i32, i32
  }
}

module attributes {stable_mosaic.version = 11 : i64} {
  func.func @_matmul_bias_kernel(%arg0: i32, %arg1: i32, %arg2: i32, %arg3: memref<16x32xbf16, #tpu.memory_space<vmem>>, %arg4: memref<32x64xbf16, #tpu.memory_space<vmem>>, %arg5: memref<1x64xf32, #tpu.memory_space<vmem>>, %arg6: memref<16x64xbf16, #tpu.memory_space<vmem>>, %arg7: memref<16x64xf32, #tpu.memory_space<vmem>>) attributes {dimension_semantics = [#tpu.dimension_semantics<parallel>, #tpu.dimension_semantics<parallel>, #tpu.dimension_semantics<arbitrary>], iteration_bounds = array<i64: 1, 1, 1>, scalar_prefetch = 0 : i64, scratch_operands = 1 : i64, tpu.core_type = #tpu.core_type<tc>, window_params = [{transform_indices = @transform_0, window_bounds = array<i64: 16, 32>}, {transform_indices = @transform_1, window_bounds = array<i64: 32, 64>}, {transform_indices = @transform_2, window_bounds = array<i64: 1, 64>}, {transform_indices = @transform_3, window_bounds = array<i64: 16, 64>}]} {
    %c0_i32 = arith.constant 0 : i32
    %0 = arith.cmpi eq, %arg2, %c0_i32 : i32
    %1 = arith.extui %0 : i1 to i32
    %c0_i32_0 = arith.constant 0 : i32
    %2 = arith.cmpi ne, %1, %c0_i32_0 : i32
    scf.if %2 {
      %cst_10 = arith.constant 0.000000e+00 : f32
      %12 = vector.broadcast %cst_10 : f32 to vector<16x64xf32>
      %c0_11 = arith.constant 0 : index
      %c0_12 = arith.constant 0 : index
      %13 = vector.load %arg7[%c0_11, %c0_12] : memref<16x64xf32, #tpu.memory_space<vmem>>, vector<16x64xf32>
      tpu.vector_store %arg7[%c0_11, %c0_12], %12 {strides = array<i32>} : memref<16x64xf32, #tpu.memory_space<vmem>>, vector<16x64xf32>,
    } else {
    }
    %c0 = arith.constant 0 : index
    %c0_1 = arith.constant 0 : index
    %3 = vector.load %arg7[%c0, %c0_1] : memref<16x64xf32, #tpu.memory_space<vmem>>, vector<16x64xf32>
    %c0_2 = arith.constant 0 : index
    %c0_3 = arith.constant 0 : index
    %4 = vector.load %arg3[%c0_2, %c0_3] : memref<16x32xbf16, #tpu.memory_space<vmem>>, vector<16x32xbf16>
    %c0_4 = arith.constant 0 : index
    %c0_5 = arith.constant 0 : index
    %5 = vector.load %arg4[%c0_4, %c0_5] : memref<32x64xbf16, #tpu.memory_space<vmem>>, vector<32x64xbf16>
    %cst = arith.constant dense<0.000000e+00> : vector<16x64xf32>
    %6 = tpu.matmul %4, %5, %cst {dimension_numbers = #tpu.dot_dimension_numbers<[1], [0], [0], [1], [0, 0, 1, 1], [], []>} : vector<16x32xbf16>, vector<32x64xbf16>, vector<16x64xf32> -> vector<16x64xf32>
    %7 = arith.addf %3, %6 : vector<16x64xf32>
    %c0_6 = arith.constant 0 : index
    %c0_7 = arith.constant 0 : index
    %8 = vector.load %arg7[%c0_6, %c0_7] : memref<16x64xf32, #tpu.memory_space<vmem>>, vector<16x64xf32>
    tpu.vector_store %arg7[%c0_6, %c0_7], %7 {strides = array<i32>} : memref<16x64xf32, #tpu.memory_space<vmem>>, vector<16x64xf32>,
    %c0_i32_8 = arith.constant 0 : i32
    %9 = arith.cmpi eq, %arg2, %c0_i32_8 : i32
    %10 = arith.extui %9 : i1 to i32
    %c0_i32_9 = arith.constant 0 : i32
    %11 = arith.cmpi ne, %10, %c0_i32_9 : i32
    scf.if %11 {
      %c0_10 = arith.constant 0 : index
      %c0_11 = arith.constant 0 : index
      %12 = vector.load %arg7[%c0_10, %c0_11] : memref<16x64xf32, #tpu.memory_space<vmem>>, vector<16x64xf32>
      %c0_12 = arith.constant 0 : index
      %c0_13 = arith.constant 0 : index
      %13 = vector.load %arg5[%c0_12, %c0_13] : memref<1x64xf32, #tpu.memory_space<vmem>>, vector<1x64xf32>
      %14 = vector.broadcast %13 : vector<1x64xf32> to vector<16x64xf32>
      %15 = arith.addf %12, %14 : vector<16x64xf32>
      %cst_14 = arith.constant 5.000000e-01 : f32
      %16 = vector.broadcast %cst_14 : f32 to vector<16x64xf32>
      %17 = arith.mulf %16, %15 : vector<16x64xf32>
      %cst_15 = arith.constant 4.471500e-02 : f32
      %18 = vector.broadcast %cst_15 : f32 to vector<16x64xf32>
      %19 = arith.mulf %18, %15 : vector<16x64xf32>
      %20 = arith.mulf %19, %15 : vector<16x64xf32>
      %21 = arith.mulf %20, %15 : vector<16x64xf32>
      %22 = arith.addf %15, %21 : vector<16x64xf32>
      %cst_16 = arith.constant 0.797884583 : f32
      %23 = vector.broadcast %cst_16 : f32 to vector<16x64xf32>
      %24 = arith.mulf %23, %22 : vector<16x64xf32>
      %25 = math.tanh %24 : vector<16x64xf32>
      %cst_17 = arith.constant 1.000000e+00 : f32
      %26 = vector.broadcast %cst_17 : f32 to vector<16x64xf32>
      %27 = arith.addf %26, %25 : vector<16x64xf32>
      %28 = arith.mulf %17, %27 : vector<16x64xf32>
      %29 = arith.truncf %28 : vector<16x64xf32> to vector<16x64xbf16>
      %c0_18 = arith.constant 0 : index
      %c0_19 = arith.constant 0 : index
      %30 = vector.load %arg6[%c0_18, %c0_19] : memref<16x64xbf16, #tpu.memory_space<vmem>>, vector<16x64xbf16>
      tpu.vector_store %arg6[%c0_18, %c0_19], %29 {strides = array<i32>} : memref<16x64xbf16, #tpu.memory_space<vmem>>, vector<16x64xbf16>,
    } else {
    }
    return
  }
  func.func @transform_0(%arg0: i32, %arg1: i32, %arg2: i32) -> (i32, i32) {
    %c0_i32 = arith.constant 0 : i32
    return %arg0, %arg2 : i32, i32
  }
  func.func @transform_1(%arg0: i32, %arg1: i32, %arg2: i32) -> (i32, i32) {
    %c0_i32 = arith.constant 0 : i32
    return %arg2, %arg1 : i32, i32
  }
  func.func @transform_2(%arg0: i32, %arg1: i32, %arg2: i32) -> (i32, i32) {
    %c0_i32 = arith.constant 0 : i32
    %c0_i32_0 = arith.constant 0 : i32
    return %c0_i32, %arg1 : i32, i32
  }
  func.func @transform_3(%arg0: i32, %arg1: i32, %arg2: i32) -> (i32, i32) {
    %c0_i32 = arith.constant 0 : i32
    return %arg0, %arg1 : i32, i32
  }
}

module attributes {stable_mosaic.version = 11 : i64} {
  func.func @_matmul_bias_res_ln_kernel(%arg0: i32, %arg1: i32, %arg2: memref<16x64xbf16, #tpu.memory_space<vmem>>, %arg3: memref<64x32xbf16, #tpu.memory_space<vmem>>, %arg4: memref<1x32xf32, #tpu.memory_space<vmem>>, %arg5: memref<16x32xbf16, #tpu.memory_space<vmem>>, %arg6: memref<1x32xf32, #tpu.memory_space<vmem>>, %arg7: memref<1x32xf32, #tpu.memory_space<vmem>>, %arg8: memref<16x32xbf16, #tpu.memory_space<vmem>>, %arg9: memref<16x32xf32, #tpu.memory_space<vmem>>) attributes {dimension_semantics = [#tpu.dimension_semantics<parallel>, #tpu.dimension_semantics<arbitrary>], iteration_bounds = array<i64: 1, 1>, scalar_prefetch = 0 : i64, scratch_operands = 1 : i64, tpu.core_type = #tpu.core_type<tc>, window_params = [{transform_indices = @transform_0, window_bounds = array<i64: 16, 64>}, {transform_indices = @transform_1, window_bounds = array<i64: 64, 32>}, {pipeline_mode = #tpu.pipeline_mode<synchronous>, transform_indices = @transform_2, window_bounds = array<i64: 1, 32>}, {transform_indices = @transform_3, window_bounds = array<i64: 16, 32>}, {pipeline_mode = #tpu.pipeline_mode<synchronous>, transform_indices = @transform_4, window_bounds = array<i64: 1, 32>}, {pipeline_mode = #tpu.pipeline_mode<synchronous>, transform_indices = @transform_5, window_bounds = array<i64: 1, 32>}, {transform_indices = @transform_6, window_bounds = array<i64: 16, 32>}]} {
    %c0_i32 = arith.constant 0 : i32
    %0 = arith.cmpi eq, %arg1, %c0_i32 : i32
    %1 = arith.extui %0 : i1 to i32
    %c0_i32_0 = arith.constant 0 : i32
    %2 = arith.cmpi ne, %1, %c0_i32_0 : i32
    scf.if %2 {
      %cst_10 = arith.constant 0.000000e+00 : f32
      %12 = vector.broadcast %cst_10 : f32 to vector<16x32xf32>
      %c0_11 = arith.constant 0 : index
      %c0_12 = arith.constant 0 : index
      %13 = vector.load %arg9[%c0_11, %c0_12] : memref<16x32xf32, #tpu.memory_space<vmem>>, vector<16x32xf32>
      tpu.vector_store %arg9[%c0_11, %c0_12], %12 {strides = array<i32>} : memref<16x32xf32, #tpu.memory_space<vmem>>, vector<16x32xf32>,
    } else {
    }
    %c0 = arith.constant 0 : index
    %c0_1 = arith.constant 0 : index
    %3 = vector.load %arg9[%c0, %c0_1] : memref<16x32xf32, #tpu.memory_space<vmem>>, vector<16x32xf32>
    %c0_2 = arith.constant 0 : index
    %c0_3 = arith.constant 0 : index
    %4 = vector.load %arg2[%c0_2, %c0_3] : memref<16x64xbf16, #tpu.memory_space<vmem>>, vector<16x64xbf16>
    %c0_4 = arith.constant 0 : index
    %c0_5 = arith.constant 0 : index
    %5 = vector.load %arg3[%c0_4, %c0_5] : memref<64x32xbf16, #tpu.memory_space<vmem>>, vector<64x32xbf16>
    %cst = arith.constant dense<0.000000e+00> : vector<16x32xf32>
    %6 = tpu.matmul %4, %5, %cst {dimension_numbers = #tpu.dot_dimension_numbers<[1], [0], [0], [1], [0, 0, 1, 1], [], []>} : vector<16x64xbf16>, vector<64x32xbf16>, vector<16x32xf32> -> vector<16x32xf32>
    %7 = arith.addf %3, %6 : vector<16x32xf32>
    %c0_6 = arith.constant 0 : index
    %c0_7 = arith.constant 0 : index
    %8 = vector.load %arg9[%c0_6, %c0_7] : memref<16x32xf32, #tpu.memory_space<vmem>>, vector<16x32xf32>
    tpu.vector_store %arg9[%c0_6, %c0_7], %7 {strides = array<i32>} : memref<16x32xf32, #tpu.memory_space<vmem>>, vector<16x32xf32>,
    %c0_i32_8 = arith.constant 0 : i32
    %9 = arith.cmpi eq, %arg1, %c0_i32_8 : i32
    %10 = arith.extui %9 : i1 to i32
    %c0_i32_9 = arith.constant 0 : i32
    %11 = arith.cmpi ne, %10, %c0_i32_9 : i32
    scf.if %11 {
      %c0_10 = arith.constant 0 : index
      %c0_11 = arith.constant 0 : index
      %12 = vector.load %arg9[%c0_10, %c0_11] : memref<16x32xf32, #tpu.memory_space<vmem>>, vector<16x32xf32>
      %c0_12 = arith.constant 0 : index
      %c0_13 = arith.constant 0 : index
      %13 = vector.load %arg4[%c0_12, %c0_13] : memref<1x32xf32, #tpu.memory_space<vmem>>, vector<1x32xf32>
      %14 = vector.broadcast %13 : vector<1x32xf32> to vector<16x32xf32>
      %15 = arith.addf %12, %14 : vector<16x32xf32>
      %c0_14 = arith.constant 0 : index
      %c0_15 = arith.constant 0 : index
      %16 = vector.load %arg5[%c0_14, %c0_15] : memref<16x32xbf16, #tpu.memory_space<vmem>>, vector<16x32xbf16>
      %17 = arith.extf %16 : vector<16x32xbf16> to vector<16x32xf32>
      %18 = arith.addf %15, %17 : vector<16x32xf32>
      %cst_16 = arith.constant dense<0.000000e+00> : vector<16xf32>
      %19 = vector.multi_reduction <add>, %18, %cst_16 [1] : vector<16x32xf32> to vector<16xf32>
      %20 = vector.shape_cast %19 : vector<16xf32> to vector<16x1xf32>
      %cst_17 = arith.constant 3.200000e+01 : f32
      %21 = vector.broadcast %cst_17 : f32 to vector<16x1xf32>
      %22 = arith.divf %20, %21 : vector<16x1xf32>
      %23 = vector.broadcast %22 : vector<16x1xf32> to vector<16x32xf32>
      %24 = arith.subf %18, %23 : vector<16x32xf32>
      %25 = arith.mulf %24, %24 : vector<16x32xf32>
      %cst_18 = arith.constant dense<0.000000e+00> : vector<16xf32>
      %26 = vector.multi_reduction <add>, %25, %cst_18 [1] : vector<16x32xf32> to vector<16xf32>
      %27 = vector.shape_cast %26 : vector<16xf32> to vector<16x1xf32>
      %cst_19 = arith.constant 3.200000e+01 : f32
      %28 = vector.broadcast %cst_19 : f32 to vector<16x1xf32>
      %29 = arith.divf %27, %28 : vector<16x1xf32>
      %cst_20 = arith.constant 9.99999996E-13 : f32
      %30 = vector.broadcast %cst_20 : f32 to vector<16x1xf32>
      %31 = arith.addf %29, %30 : vector<16x1xf32>
      %32 = math.rsqrt %31 : vector<16x1xf32>
      %33 = vector.broadcast %32 : vector<16x1xf32> to vector<16x32xf32>
      %34 = arith.mulf %24, %33 : vector<16x32xf32>
      %c0_21 = arith.constant 0 : index
      %c0_22 = arith.constant 0 : index
      %35 = vector.load %arg6[%c0_21, %c0_22] : memref<1x32xf32, #tpu.memory_space<vmem>>, vector<1x32xf32>
      %36 = vector.broadcast %35 : vector<1x32xf32> to vector<16x32xf32>
      %37 = arith.mulf %34, %36 : vector<16x32xf32>
      %c0_23 = arith.constant 0 : index
      %c0_24 = arith.constant 0 : index
      %38 = vector.load %arg7[%c0_23, %c0_24] : memref<1x32xf32, #tpu.memory_space<vmem>>, vector<1x32xf32>
      %39 = vector.broadcast %38 : vector<1x32xf32> to vector<16x32xf32>
      %40 = arith.addf %37, %39 : vector<16x32xf32>
      %41 = arith.truncf %40 : vector<16x32xf32> to vector<16x32xbf16>
      %c0_25 = arith.constant 0 : index
      %c0_26 = arith.constant 0 : index
      %42 = vector.load %arg8[%c0_25, %c0_26] : memref<16x32xbf16, #tpu.memory_space<vmem>>, vector<16x32xbf16>
      tpu.vector_store %arg8[%c0_25, %c0_26], %41 {strides = array<i32>} : memref<16x32xbf16, #tpu.memory_space<vmem>>, vector<16x32xbf16>,
    } else {
    }
    return
  }
  func.func @transform_0(%arg0: i32, %arg1: i32) -> (i32, i32) {
    %c0_i32 = arith.constant 0 : i32
    return %arg0, %arg1 : i32, i32
  }
  func.func @transform_1(%arg0: i32, %arg1: i32) -> (i32, i32) {
    %c0_i32 = arith.constant 0 : i32
    %c0_i32_0 = arith.constant 0 : i32
    return %arg1, %c0_i32 : i32, i32
  }
  func.func @transform_2(%arg0: i32, %arg1: i32) -> (i32, i32) {
    %c0_i32 = arith.constant 0 : i32
    %c0_i32_0 = arith.constant 0 : i32
    %c0_i32_1 = arith.constant 0 : i32
    return %c0_i32, %c0_i32_0 : i32, i32
  }
  func.func @transform_3(%arg0: i32, %arg1: i32) -> (i32, i32) {
    %c0_i32 = arith.constant 0 : i32
    %c0_i32_0 = arith.constant 0 : i32
    return %arg0, %c0_i32 : i32, i32
  }
  func.func @transform_4(%arg0: i32, %arg1: i32) -> (i32, i32) {
    %c0_i32 = arith.constant 0 : i32
    %c0_i32_0 = arith.constant 0 : i32
    %c0_i32_1 = arith.constant 0 : i32
    return %c0_i32, %c0_i32_0 : i32, i32
  }
  func.func @transform_5(%arg0: i32, %arg1: i32) -> (i32, i32) {
    %c0_i32 = arith.constant 0 : i32
    %c0_i32_0 = arith.constant 0 : i32
    %c0_i32_1 = arith.constant 0 : i32
    return %c0_i32, %c0_i32_0 : i32, i32
  }
  func.func @transform_6(%arg0: i32, %arg1: i32) -> (i32, i32) {
    %c0_i32 = arith.constant 0 : i32
    %c0_i32_0 = arith.constant 0 : i32
    return %arg0, %c0_i32 : i32, i32
  }
}

module attributes {stable_mosaic.version = 11 : i64} {
  func.func @_matmul_bias_kernel(%arg0: i32, %arg1: i32, %arg2: i32, %arg3: memref<2x32xbf16, #tpu.memory_space<vmem>>, %arg4: memref<32x128xbf16, #tpu.memory_space<vmem>>, %arg5: memref<1x128xf32, #tpu.memory_space<vmem>>, %arg6: memref<2x128xf32, #tpu.memory_space<vmem>>, %arg7: memref<2x128xf32, #tpu.memory_space<vmem>>) attributes {dimension_semantics = [#tpu.dimension_semantics<parallel>, #tpu.dimension_semantics<parallel>, #tpu.dimension_semantics<arbitrary>], iteration_bounds = array<i64: 1, 1, 1>, scalar_prefetch = 0 : i64, scratch_operands = 1 : i64, tpu.core_type = #tpu.core_type<tc>, window_params = [{transform_indices = @transform_0, window_bounds = array<i64: 2, 32>}, {transform_indices = @transform_1, window_bounds = array<i64: 32, 128>}, {transform_indices = @transform_2, window_bounds = array<i64: 1, 128>}, {transform_indices = @transform_3, window_bounds = array<i64: 2, 128>}]} {
    %c0_i32 = arith.constant 0 : i32
    %0 = arith.cmpi eq, %arg2, %c0_i32 : i32
    %1 = arith.extui %0 : i1 to i32
    %c0_i32_0 = arith.constant 0 : i32
    %2 = arith.cmpi ne, %1, %c0_i32_0 : i32
    scf.if %2 {
      %cst_10 = arith.constant 0.000000e+00 : f32
      %12 = vector.broadcast %cst_10 : f32 to vector<2x128xf32>
      %c0_11 = arith.constant 0 : index
      %c0_12 = arith.constant 0 : index
      %13 = vector.load %arg7[%c0_11, %c0_12] : memref<2x128xf32, #tpu.memory_space<vmem>>, vector<2x128xf32>
      tpu.vector_store %arg7[%c0_11, %c0_12], %12 {strides = array<i32>} : memref<2x128xf32, #tpu.memory_space<vmem>>, vector<2x128xf32>,
    } else {
    }
    %c0 = arith.constant 0 : index
    %c0_1 = arith.constant 0 : index
    %3 = vector.load %arg7[%c0, %c0_1] : memref<2x128xf32, #tpu.memory_space<vmem>>, vector<2x128xf32>
    %c0_2 = arith.constant 0 : index
    %c0_3 = arith.constant 0 : index
    %4 = vector.load %arg3[%c0_2, %c0_3] : memref<2x32xbf16, #tpu.memory_space<vmem>>, vector<2x32xbf16>
    %c0_4 = arith.constant 0 : index
    %c0_5 = arith.constant 0 : index
    %5 = vector.load %arg4[%c0_4, %c0_5] : memref<32x128xbf16, #tpu.memory_space<vmem>>, vector<32x128xbf16>
    %cst = arith.constant dense<0.000000e+00> : vector<2x128xf32>
    %6 = tpu.matmul %4, %5, %cst {dimension_numbers = #tpu.dot_dimension_numbers<[1], [0], [0], [1], [0, 0, 1, 1], [], []>} : vector<2x32xbf16>, vector<32x128xbf16>, vector<2x128xf32> -> vector<2x128xf32>
    %7 = arith.addf %3, %6 : vector<2x128xf32>
    %c0_6 = arith.constant 0 : index
    %c0_7 = arith.constant 0 : index
    %8 = vector.load %arg7[%c0_6, %c0_7] : memref<2x128xf32, #tpu.memory_space<vmem>>, vector<2x128xf32>
    tpu.vector_store %arg7[%c0_6, %c0_7], %7 {strides = array<i32>} : memref<2x128xf32, #tpu.memory_space<vmem>>, vector<2x128xf32>,
    %c0_i32_8 = arith.constant 0 : i32
    %9 = arith.cmpi eq, %arg2, %c0_i32_8 : i32
    %10 = arith.extui %9 : i1 to i32
    %c0_i32_9 = arith.constant 0 : i32
    %11 = arith.cmpi ne, %10, %c0_i32_9 : i32
    scf.if %11 {
      %c0_10 = arith.constant 0 : index
      %c0_11 = arith.constant 0 : index
      %12 = vector.load %arg7[%c0_10, %c0_11] : memref<2x128xf32, #tpu.memory_space<vmem>>, vector<2x128xf32>
      %c0_12 = arith.constant 0 : index
      %c0_13 = arith.constant 0 : index
      %13 = vector.load %arg5[%c0_12, %c0_13] : memref<1x128xf32, #tpu.memory_space<vmem>>, vector<1x128xf32>
      %14 = vector.broadcast %13 : vector<1x128xf32> to vector<2x128xf32>
      %15 = arith.addf %12, %14 : vector<2x128xf32>
      %c0_14 = arith.constant 0 : index
      %c0_15 = arith.constant 0 : index
      %16 = vector.load %arg6[%c0_14, %c0_15] : memref<2x128xf32, #tpu.memory_space<vmem>>, vector<2x128xf32>
      tpu.vector_store %arg6[%c0_14, %c0_15], %15 {strides = array<i32>} : memref<2x128xf32, #tpu.memory_space<vmem>>, vector<2x128xf32>,
    } else {
    }
    return
  }
  func.func @transform_0(%arg0: i32, %arg1: i32, %arg2: i32) -> (i32, i32) {
    %c0_i32 = arith.constant 0 : i32
    return %arg0, %arg2 : i32, i32
  }
  func.func @transform_1(%arg0: i32, %arg1: i32, %arg2: i32) -> (i32, i32) {
    %c0_i32 = arith.constant 0 : i32
    return %arg2, %arg1 : i32, i32
  }
  func.func @transform_2(%arg0: i32, %arg1: i32, %arg2: i32) -> (i32, i32) {
    %c0_i32 = arith.constant 0 : i32
    %c0_i32_0 = arith.constant 0 : i32
    return %c0_i32, %arg1 : i32, i32
  }
  func.func @transform_3(%arg0: i32, %arg1: i32, %arg2: i32) -> (i32, i32) {
    %c0_i32 = arith.constant 0 : i32
    return %arg0, %arg1 : i32, i32
  }
}

</mosaic_0001>

<llo_original>
// kernel: _lambda_.13
$region0: #{_lambda_.13}
  #allocation0 [shape = 'u32[]', space=smem, size = 0x4, offset = 0x4, fixed_abs, tag = 'smem constant byte address 0x4 - core index']
  #allocation1 [shape = 'u32[72,128]{1,0:T(1,128)}', space=vmem, size = 0x9000, scoped, tag = 'internal scratch']
  #allocation2 [shape = 'f32[16,96]{1,0:T(8,128)}', space=vmem, size = 0x2000, scoped, tag = 'scratch operand']
  %s0 = inlined_call_operand.vmem [shape: bf16[16,32], index: 0, kind: input, shape index: {}]
  %s1 = inlined_call_operand.vmem [shape: bf16[32,96], index: 1, kind: input, shape index: {}]
  %s2 = inlined_call_operand.vmem [shape: f32[1,96], index: 2, kind: input, shape index: {}]
  %s3 = inlined_call_operand.vmem [shape: bf16[16,96], index: 3, kind: output, shape index: {}]
  %s4 = sld [smem:[#allocation0]]
  $region30: #{_lambda_.13} parent=0
    _
  %s6 = ssub.s32 1, %s4
  %s7 = scalar_select 0, %s6, %s4
  // Predicated region
  $region2: #{_lambda_.13} parent=0 // pred_check
    _
  $region3: #{_lambda_.13} parent=0 // pred_check_branch
    %9 = sbr.rel (0) target = $region5
  $region4: #{_lambda_.13} parent=0 // pred_region
    _
  $region5: #{_lambda_.13} parent=0 // pred_fallthru
    _
  // Predicated region
  $region6: #{_lambda_.13} parent=0 // pred_check
    _
  $region7: #{_lambda_.13} parent=0 // pred_check_branch
    %11 = sbr.rel (0) target = $region9
  $region8: #{_lambda_.13} parent=0 // pred_region
    _
  $region9: #{_lambda_.13} parent=0 // pred_fallthru
    _
  // Predicated region
  $region10: #{_lambda_.13} parent=0 // pred_check
    _
  $region11: #{_lambda_.13} parent=0 // pred_check_branch
    %13 = sbr.rel (0) target = $region13
  $region12: #{_lambda_.13} parent=0 // pred_region
    _
  $region13: #{_lambda_.13} parent=0 // pred_fallthru
    _
  %p15 = scmp.eq.s32.totalorder 0, 0
  // Predicated region
  $region14: #{_lambda_.13} parent=0 // pred_check
    %p16 = pneg %p15
  $region15: #{_lambda_.13} parent=0 // pred_check_branch
    %18 = sbr.rel (%p16) target = $region17
  $region16: #{_lambda_.13} parent=0 // pred_region
    %vm19 = vcmask 785408
    %20 = vst.msk [vmem:[#allocation2] sm:$0xff] %vm19, 0.0
    %21 = vst.msk [vmem:[#allocation2 + $0x8] sm:$0xff] %vm19, 0.0
  $region17: #{_lambda_.13} parent=0 // pred_fallthru
    _
  %v22 = vld [vmem:[#allocation2] sm:$0xff]
  %v23 = vld [vmem:[#allocation2 + $0x8] sm:$0xff]
  %v24 = vld [vmem:[%s0] sm:$0xf]
  %v25 = vld [vmem:[%s0 + $0x4] sm:$0xf]
  %v26 = vld [vmem:[%s1] sm:$0xf]
  %v27 = vld [vmem:[%s1 + $0x4] sm:$0xf]
  %v28 = vld [vmem:[%s1 + $0x8] sm:$0xf]
  %v29 = vld [vmem:[%s1 + $0xc] sm:$0xf]
  %v32 = vunpack.c.l.b16 %v24
  %v33 = vunpack.c.l.b16 %v25
  %v34 = vpack.c.b16 %v33, %v32
  %v39 = vunpack.c.l.b16 %v26
  %v40 = vunpack.c.l.b16 %v27
  %v41 = vunpack.c.l.b16 %v28
  %v42 = vunpack.c.l.b16 %v29
  %v43 = vpack.c.b16 %v40, %v39
  %v44 = vpack.c.b16 %v42, %v41
  %vm47 = vcmask 261120
  %v49 = vsel %vm47, %v34, 0
  %51 = vmatpush.bf16.msra.mxu0 0
  %52 = vmatpush.bf16.msra.mxu0 0
  %53 = vmatpush.bf16.msra.mxu0 0
  %54 = vmatpush.bf16.msra.mxu0 0
  %55 = vmatpush.bf16.msra.mxu0 0
  %56 = vmatpush.bf16.msra.mxu0 0
  %57 = vmatpush.bf16.msra.mxu0 %v44
  %58 = vmatpush.bf16.msra.mxu0 %v43
  %59 = vmatmul.bf16.gmra.mxu0 %v49
  %v60 = vpop.f32.mrf.mxu0
  %v61 = vadd.f32 0.0, %v60
  %v62 = vpop.f32.mrf.mxu0
  %v63 = vadd.f32 0.0, %v62
  %64 = vdwg.mxu0
  %v65 = vadd.f32 %v22, %v61
  %v66 = vadd.f32 %v23, %v63
  %vm67 = vcmask 785408
  %68 = vst.msk [vmem:[#allocation2] sm:$0xff] %vm67, %v65
  %69 = vst.msk [vmem:[#allocation2 + $0x8] sm:$0xff] %vm67, %v66
  // Predicated region
  $region18: #{_lambda_.13} parent=0 // pred_check
    %p70 = pneg %p15
  $region19: #{_lambda_.13} parent=0 // pred_check_branch
    %72 = sbr.rel (%p70) target = $region21
  $region20: #{_lambda_.13} parent=0 // pred_region
    %v73 = vld [vmem:[#allocation2] sm:$0xff]
    %v74 = vld [vmem:[#allocation2 + $0x8] sm:$0xff]
    %v75 = vld [vmem:[%s2] sm:$0x1]
    %v77 = vperm.slane %v75, 0
    %v79 = vadd.f32 %v73, %v77
    %v80 = vadd.f32 %v74, %v77
    %v81 = vpack.c.bf16 %v79, %v79
    %v82 = vpack.c.bf16 %v80, %v80
    %vm83 = vcmask 781312
    %84 = vst.msk [vmem:[%s3] sm:$0xf] %vm83, %v81
    %85 = vst.msk [vmem:[%s3 + $0x4] sm:$0xf] %vm83, %v82
  $region21: #{_lambda_.13} parent=0 // pred_fallthru
    _
  // Predicated region
  $region22: #{_lambda_.13} parent=0 // pred_check
    _
  $region23: #{_lambda_.13} parent=0 // pred_check_branch
    %87 = sbr.rel (0) target = $region25
  $region24: #{_lambda_.13} parent=0 // pred_region
    _
  $region25: #{_lambda_.13} parent=0 // pred_fallthru
    _
  // Predicated region
  $region26: #{_lambda_.13} parent=0 // pred_check
    _
  $region27: #{_lambda_.13} parent=0 // pred_check_branch
    %89 = sbr.rel (0) target = $region29
  $region28: #{_lambda_.13} parent=0 // pred_region
    _
  $region29: #{_lambda_.13} parent=0 // pred_fallthru
    _

// kernel: _lambda_.12
$region0: #{_lambda_.12}
  #allocation0 [shape = 'u32[]', space=smem, size = 0x4, offset = 0x4, fixed_abs, tag = 'smem constant byte address 0x4 - core index']
  #allocation1 [shape = 'u32[72,128]{1,0:T(1,128)}', space=vmem, size = 0x9000, scoped, tag = 'internal scratch']
  %s0 = inlined_call_operand.vmem [shape: f32[16,32], index: 0, kind: input, shape index: {}]
  %s1 = inlined_call_operand.vmem [shape: f32[16,32], index: 1, kind: input, shape index: {}]
  %s2 = inlined_call_operand.vmem [shape: f32[1,32], index: 2, kind: input, shape index: {}]
  %s3 = inlined_call_operand.vmem [shape: f32[1,32], index: 3, kind: input, shape index: {}]
  %s4 = inlined_call_operand.vmem [shape: bf16[16,32], index: 4, kind: output, shape index: {}]
  %s5 = sld [smem:[#allocation0]]
  $region26: #{_lambda_.12} parent=0
    _
  %s7 = ssub.s32 1, %s5
  %s8 = scalar_select 0, %s7, %s5
  // Predicated region
  $region2: #{_lambda_.12} parent=0 // pred_check
    _
  $region3: #{_lambda_.12} parent=0 // pred_check_branch
    %10 = sbr.rel (0) target = $region5
  $region4: #{_lambda_.12} parent=0 // pred_region
    _
  $region5: #{_lambda_.12} parent=0 // pred_fallthru
    _
  // Predicated region
  $region6: #{_lambda_.12} parent=0 // pred_check
    _
  $region7: #{_lambda_.12} parent=0 // pred_check_branch
    %12 = sbr.rel (0) target = $region9
  $region8: #{_lambda_.12} parent=0 // pred_region
    _
  $region9: #{_lambda_.12} parent=0 // pred_fallthru
    _
  // Predicated region
  $region10: #{_lambda_.12} parent=0 // pred_check
    _
  $region11: #{_lambda_.12} parent=0 // pred_check_branch
    %14 = sbr.rel (0) target = $region13
  $region12: #{_lambda_.12} parent=0 // pred_region
    _
  $region13: #{_lambda_.12} parent=0 // pred_fallthru
    _
  // Predicated region
  $region14: #{_lambda_.12} parent=0 // pred_check
    _
  $region15: #{_lambda_.12} parent=0 // pred_check_branch
    %16 = sbr.rel (0) target = $region17
  $region16: #{_lambda_.12} parent=0 // pred_region
    _
  $region17: #{_lambda_.12} parent=0 // pred_fallthru
    _
  %v17 = vld [vmem:[%s0] sm:$0xff]
  %v18 = vld [vmem:[%s0 + $0x8] sm:$0xff]
  %v19 = vld [vmem:[%s1] sm:$0xff]
  %v20 = vld [vmem:[%s1 + $0x8] sm:$0xff]
  %v21 = vadd.f32 %v17, %v19
  %v22 = vadd.f32 %v18, %v20
  %vm23 = vcmask 261120
  %v24 = vsel %vm23, %v21, 0.0
  %25 = vadd.xlane.f32.xlu0 %v24
  %v26 = vpop.xlane.xlu0 %25
  %v27 = vsel %vm23, %v22, 0.0
  %28 = vadd.xlane.f32.xlu0 %v27
  %v29 = vpop.xlane.xlu0 %28
  %v30 = vrcp.pop 32.0
  %v31 = vmul.f32 32.0, %v30
  %v32 = vsub.f32 1.0, %v31
  %v33 = vmul.f32 %v30, %v32
  %v34 = vadd.f32 %v30, %v33
  %vm35 = vweird.f32 %v30
  %v36 = vsel %vm35, %v30, %v34
  %v37 = vmul.f32 %v26, %v36
  %v38 = vmul.f32 %v29, %v36
  %v39 = vsub.f32 %v21, %v37
  %v40 = vsub.f32 %v22, %v38
  %v41 = vmul.f32 %v39, %v39
  %v42 = vmul.f32 %v40, %v40
  %v43 = vsel %vm23, %v41, 0.0
  %44 = vadd.xlane.f32.xlu0 %v43
  %v45 = vpop.xlane.xlu0 %44
  %v46 = vsel %vm23, %v42, 0.0
  %47 = vadd.xlane.f32.xlu0 %v46
  %v48 = vpop.xlane.xlu0 %47
  %v49 = vmul.f32 %v45, %v36
  %v50 = vmul.f32 %v48, %v36
  %v51 = vadd.f32 %v49, 1e-12
  %v52 = vadd.f32 %v50, 1e-12
  %v53 = vrsqrt.pop %v51
  %v54 = vmul.f32 %v53, %v51
  %v55 = vmul.f32 %v54, %v53
  %v56 = vmul.f32 0.5, %v55
  %v57 = vsub.f32 1.5, %v56
  %v58 = vmul.f32 %v53, %v57
  %vm59 = vweird.f32 %v51
  %vm60 = vweird.f32 %v53
  %vm61 = vmor %vm59, %vm60
  %v62 = vsel %vm61, %v53, %v58
  %v63 = vrsqrt.pop %v52
  %v64 = vmul.f32 %v63, %v52
  %v65 = vmul.f32 %v64, %v63
  %v66 = vmul.f32 0.5, %v65
  %v67 = vsub.f32 1.5, %v66
  %v68 = vmul.f32 %v63, %v67
  %vm69 = vweird.f32 %v52
  %vm70 = vweird.f32 %v63
  %vm71 = vmor %vm69, %vm70
  %v72 = vsel %vm71, %v63, %v68
  %v73 = vmul.f32 %v39, %v62
  %v74 = vmul.f32 %v40, %v72
  %v75 = vld [vmem:[%s2] sm:$0x1]
  %v77 = vperm.slane %v75, 0
  %v79 = vmul.f32 %v73, %v77
  %v80 = vmul.f32 %v74, %v77
  %v81 = vld [vmem:[%s3] sm:$0x1]
  %v83 = vperm.slane %v81, 0
  %v85 = vadd.f32 %v79, %v83
  %v86 = vadd.f32 %v80, %v83
  %v87 = vpack.c.bf16 %v85, %v85
  %v88 = vpack.c.bf16 %v86, %v86
  %vm89 = vcmask 257024
  %90 = vst.msk [vmem:[%s4] sm:$0xf] %vm89, %v87
  %91 = vst.msk [vmem:[%s4 + $0x4] sm:$0xf] %vm89, %v88
  // Predicated region
  $region18: #{_lambda_.12} parent=0 // pred_check
    _
  $region19: #{_lambda_.12} parent=0 // pred_check_branch
    %93 = sbr.rel (0) target = $region21
  $region20: #{_lambda_.12} parent=0 // pred_region
    _
  $region21: #{_lambda_.12} parent=0 // pred_fallthru
    _
  // Predicated region
  $region22: #{_lambda_.12} parent=0 // pred_check
    _
  $region23: #{_lambda_.12} parent=0 // pred_check_branch
    %95 = sbr.rel (0) target = $region25
  $region24: #{_lambda_.12} parent=0 // pred_region
    _
  $region25: #{_lambda_.12} parent=0 // pred_fallthru
    _

// kernel: _lambda_.14
$region0: #{_lambda_.14}
  #allocation0 [shape = 'u32[]', space=smem, size = 0x4, offset = 0x4, fixed_abs, tag = 'smem constant byte address 0x4 - core index']
  #allocation1 [shape = 'u32[72,128]{1,0:T(1,128)}', space=vmem, size = 0x9000, scoped, tag = 'internal scratch']
  #allocation2 [shape = 'f32[8,1]{1,0:T(8,128)}', space=vmem, size = 0x1000, scoped, tag = 'scratch operand']
  #allocation3 [shape = 'f32[8,1]{1,0:T(8,128)}', space=vmem, size = 0x1000, scoped, tag = 'scratch operand']
  #allocation4 [shape = 'f32[8,8]{1,0:T(8,128)}', space=vmem, size = 0x1000, scoped, tag = 'scratch operand']
  %s0 = inlined_call_operand.vmem [shape: bf16[8,8,8], index: 0, kind: input, shape index: {}]
  %s1 = inlined_call_operand.vmem [shape: bf16[8,8,8], index: 1, kind: input, shape index: {}]
  %s2 = inlined_call_operand.vmem [shape: bf16[8,8,8], index: 2, kind: input, shape index: {}]
  %s3 = inlined_call_operand.vmem [shape: bf16[8,8,8], index: 3, kind: output, shape index: {}]
  %s4 = sld [smem:[#allocation0]]
  $region53: #{_lambda_.14} parent=0
    _
  %s6 = ssub.s32 1, %s4
  %s7 = scalar_select 0, %s6, %s4
  loop: start=0, step=1, limit=10
  $region2: #{_lambda_.14} parent=0 // loop_pre_header
    _
  $region3: #{_lambda_.14} parent=0 // loop_header
    %s9 = sphi 0, %s13
    %p10 = scmp.ge.s32.totalorder %s9, 10
    %s16 = sphi 0, %s35
    %s17 = sphi 0, %s31
    %s18 = sphi 0, %s27
    %s19 = sphi 0, %s16
    %s20 = sphi 0, %s17
    %s21 = sphi 0, %s18
    %s22 = sphi 0, %s19
    %s23 = sphi 0, %s20
    %s24 = sphi 0, %s21
    %s40 = sphi 0, %s42
    %s43 = sphi 0, %s40
    %s44 = sphi 0, %s43
    %s60 = sphi 0, %s44
    %s68 = sphi 0, %s70
    %s71 = sphi 0, %s68
    %s72 = sphi 0, %s71
    %s88 = sphi 0, %s72
    %s96 = sphi 0, %s98
    %s99 = sphi 0, %s96
    %s100 = sphi 0, %s99
    %s116 = sphi 0, %s100
    %s124 = sphi 0, %s126
    %s127 = sphi 0, %s124
    %s128 = sphi 0, %s127
    %s144 = sphi 0, %s128
  $region4: #{_lambda_.14} parent=0 // loop_header_branch
    %12 = sbr.rel (%p10) target = $region8
  $region5: #{_lambda_.14} parent=0 // loop_body
    %s14 = ssub.s32 %s9, 1
    %s15 = ssub.s32 %s9, 2
    %s25 = sadd.s32 1, %s18
    %p26 = scmp.ge.s32.totalorder %s25, 1
    %s27 = scalar_select %p26, 0, %s25
    %s28 = sadd.s32 1, %s17
    %s29 = scalar_select %p26, %s28, %s17
    %p30 = scmp.ge.s32.totalorder %s29, 1
    %s31 = scalar_select %p30, 0, %s29
    %s32 = sadd.s32 1, %s16
    %s33 = scalar_select %p30, %s32, %s16
    %p34 = scmp.ge.s32.totalorder %s33, 8
    %s35 = scalar_select %p34, 0, %s33
    %s36 = ssub.s32 %s16, %s35
    %s37 = ssub.s32 %s17, %s31
    %s38 = sor.u32 %s36, %s37
    %p39 = scmp.eq.s32.totalorder %s38, 0
    %s41 = sadd.s32 %s40, 1
    %s42 = scalar_select %p39, %s40, %s41
    %p45 = pneg %p39
    %p46 = scmp.eq.s32.totalorder %s9, 7
    %p47 = por %p45, %p46
    %p48 = scmp.ne.s32.totalorder %s40, %s43
    %p49 = scmp.eq.s32.totalorder %s9, 0
    %p50 = por %p48, %p49
    %p51 = scmp.ne.s32.totalorder %s40, %s43
    %p52 = scmp.eq.s32.totalorder %s14, 7
    %p53 = por %p51, %p52
    %p54 = scmp.ne.s32.totalorder %s43, %s44
    %p55 = scmp.eq.s32.totalorder %s14, 0
    %p56 = por %p54, %p55
    %p57 = scmp.ne.s32.totalorder %s43, %s44
    %p58 = scmp.eq.s32.totalorder %s15, 7
    %p59 = por %p57, %p58
    %p61 = scmp.ne.s32.totalorder %s44, %s60
    %p62 = scmp.eq.s32.totalorder %s15, 0
    %p63 = por %p61, %p62
    %s64 = ssub.s32 %s16, %s35
    %s65 = ssub.s32 %s18, %s27
    %s66 = sor.u32 %s64, %s65
    %p67 = scmp.eq.s32.totalorder %s66, 0
    %s69 = sadd.s32 %s68, 1
    %s70 = scalar_select %p67, %s68, %s69
    %p73 = pneg %p67
    %p74 = scmp.eq.s32.totalorder %s9, 7
    %p75 = por %p73, %p74
    %p76 = scmp.ne.s32.totalorder %s68, %s71
    %p77 = scmp.eq.s32.totalorder %s9, 0
    %p78 = por %p76, %p77
    %p79 = scmp.ne.s32.totalorder %s68, %s71
    %p80 = scmp.eq.s32.totalorder %s14, 7
    %p81 = por %p79, %p80
    %p82 = scmp.ne.s32.totalorder %s71, %s72
    %p83 = scmp.eq.s32.totalorder %s14, 0
    %p84 = por %p82, %p83
    %p85 = scmp.ne.s32.totalorder %s71, %s72
    %p86 = scmp.eq.s32.totalorder %s15, 7
    %p87 = por %p85, %p86
    %p89 = scmp.ne.s32.totalorder %s72, %s88
    %p90 = scmp.eq.s32.totalorder %s15, 0
    %p91 = por %p89, %p90
    %s92 = ssub.s32 %s16, %s35
    %s93 = ssub.s32 %s18, %s27
    %s94 = sor.u32 %s92, %s93
    %p95 = scmp.eq.s32.totalorder %s94, 0
    %s97 = sadd.s32 %s96, 1
    %s98 = scalar_select %p95, %s96, %s97
    %p101 = pneg %p95
    %p102 = scmp.eq.s32.totalorder %s9, 7
    %p103 = por %p101, %p102
    %p104 = scmp.ne.s32.totalorder %s96, %s99
    %p105 = scmp.eq.s32.totalorder %s9, 0
    %p106 = por %p104, %p105
    %p107 = scmp.ne.s32.totalorder %s96, %s99
    %p108 = scmp.eq.s32.totalorder %s14, 7
    %p109 = por %p107, %p108
    %p110 = scmp.ne.s32.totalorder %s99, %s100
    %p111 = scmp.eq.s32.totalorder %s14, 0
    %p112 = por %p110, %p111
    %p113 = scmp.ne.s32.totalorder %s99, %s100
    %p114 = scmp.eq.s32.totalorder %s15, 7
    %p115 = por %p113, %p114
    %p117 = scmp.ne.s32.totalorder %s100, %s116
    %p118 = scmp.eq.s32.totalorder %s15, 0
    %p119 = por %p117, %p118
    %s120 = ssub.s32 %s16, %s35
    %s121 = ssub.s32 %s17, %s31
    %s122 = sor.u32 %s120, %s121
    %p123 = scmp.eq.s32.totalorder %s122, 0
    %s125 = sadd.s32 %s124, 1
    %s126 = scalar_select %p123, %s124, %s125
    %p129 = pneg %p123
    %p130 = scmp.eq.s32.totalorder %s9, 7
    %p131 = por %p129, %p130
    %p132 = scmp.ne.s32.totalorder %s124, %s127
    %p133 = scmp.eq.s32.totalorder %s9, 0
    %p134 = por %p132, %p133
    %p135 = scmp.ne.s32.totalorder %s124, %s127
    %p136 = scmp.eq.s32.totalorder %s14, 7
    %p137 = por %p135, %p136
    %p138 = scmp.ne.s32.totalorder %s127, %s128
    %p139 = scmp.eq.s32.totalorder %s14, 0
    %p140 = por %p138, %p139
    %p141 = scmp.ne.s32.totalorder %s127, %s128
    %p142 = scmp.eq.s32.totalorder %s15, 7
    %p143 = por %p141, %p142
    %p145 = scmp.ne.s32.totalorder %s128, %s144
    %p146 = scmp.eq.s32.totalorder %s15, 0
    %p147 = por %p145, %p146
    %p148 = scmp.le.s32.totalorder 1, %s9
    %p149 = scmp.lt.s32.totalorder %s9, 9
    %p150 = pnand %p148, %p149
    %p151 = pneg %p150
    // Predicated region
    $region9: #{_lambda_.14} parent=5 // pred_check
      _
    $region10: #{_lambda_.14} parent=5 // pred_check_branch
      %153 = sbr.rel (%p150) target = $region12
    $region11: #{_lambda_.14} parent=5 // pred_region
      %s154 = ssub.s32 %s9, 1
    $region12: #{_lambda_.14} parent=5 // pred_fallthru
      _
    %p155 = scmp.lt.s32.totalorder %s9, 8
    // Predicated region
    $region13: #{_lambda_.14} parent=5 // pred_check
      %p156 = pneg %p155
    $region14: #{_lambda_.14} parent=5 // pred_check_branch
      %158 = sbr.rel (%p156) target = $region16
    $region15: #{_lambda_.14} parent=5 // pred_region
      // Predicated region
      $region17: #{_lambda_.14} parent=15 // pred_check
        %p159 = pneg %p50
      $region18: #{_lambda_.14} parent=15 // pred_check_branch
        %161 = sbr.rel (%p159) target = $region20
      $region19: #{_lambda_.14} parent=15 // pred_region
        %p162 = scmp.lt.s32.totalorder %s16, 7
        %s163 = scalar_select %p162, %s16, 7
        %p164 = scmp.lt.s32.totalorder %s17, 0
        %s165 = scalar_select %p164, %s17, 0
        %s166 = sadd.s32 %s165, %s163
        %s167 = smul.addr %s166, 4
        %s168 = scalar_lea.vmem %s0, %s167
      $region20: #{_lambda_.14} parent=15 // pred_fallthru
        _
      // Predicated region
      $region21: #{_lambda_.14} parent=15 // pred_check
        %p169 = pneg %p78
      $region22: #{_lambda_.14} parent=15 // pred_check_branch
        %171 = sbr.rel (%p169) target = $region24
      $region23: #{_lambda_.14} parent=15 // pred_region
        %p172 = scmp.lt.s32.totalorder %s16, 7
        %s173 = scalar_select %p172, %s16, 7
        %p174 = scmp.lt.s32.totalorder %s18, 0
        %s175 = scalar_select %p174, %s18, 0
        %s176 = sadd.s32 %s175, %s173
        %s177 = smul.addr %s176, 4
        %s178 = scalar_lea.vmem %s1, %s177
      $region24: #{_lambda_.14} parent=15 // pred_fallthru
        _
      // Predicated region
      $region25: #{_lambda_.14} parent=15 // pred_check
        %p179 = pneg %p106
      $region26: #{_lambda_.14} parent=15 // pred_check_branch
        %181 = sbr.rel (%p179) target = $region28
      $region27: #{_lambda_.14} parent=15 // pred_region
        %p182 = scmp.lt.s32.totalorder %s16, 7
        %s183 = scalar_select %p182, %s16, 7
        %p184 = scmp.lt.s32.totalorder %s18, 0
        %s185 = scalar_select %p184, %s18, 0
        %s186 = sadd.s32 %s185, %s183
        %s187 = smul.addr %s186, 4
        %s188 = scalar_lea.vmem %s2, %s187
      $region28: #{_lambda_.14} parent=15 // pred_fallthru
        _
    $region16: #{_lambda_.14} parent=5 // pred_fallthru
      _
    %p189 = scmp.le.s32.totalorder 1, %s9
    %p190 = scmp.lt.s32.totalorder %s9, 9
    %p191 = pnand %p189, %p190
    %p192 = pneg %p191
    // Predicated region
    $region29: #{_lambda_.14} parent=5 // pred_check
      _
    $region30: #{_lambda_.14} parent=5 // pred_check_branch
      %194 = sbr.rel (%p191) target = $region32
    $region31: #{_lambda_.14} parent=5 // pred_region
      %s195 = ssub.s32 %s9, 1
      %p196 = scmp.lt.s32.totalorder %s19, 7
      %s197 = scalar_select %p196, %s19, 7
      %p198 = scmp.lt.s32.totalorder %s20, 0
      %s199 = scalar_select %p198, %s20, 0
      %s200 = sadd.s32 %s199, %s197
      %s201 = smul.addr %s200, 4
      %s202 = scalar_lea.vmem %s0, %s201
      %p203 = pneg %p56
      %p204 = pneg %p53
      %p205 = scmp.lt.s32.totalorder %s19, 7
      %s206 = scalar_select %p205, %s19, 7
      %p207 = scmp.lt.s32.totalorder %s21, 0
      %s208 = scalar_select %p207, %s21, 0
      %s209 = sadd.s32 %s208, %s206
      %s210 = smul.addr %s209, 4
      %s211 = scalar_lea.vmem %s1, %s210
      %p212 = pneg %p84
      %p213 = pneg %p81
      %p214 = scmp.lt.s32.totalorder %s19, 7
      %s215 = scalar_select %p214, %s19, 7
      %p216 = scmp.lt.s32.totalorder %s21, 0
      %s217 = scalar_select %p216, %s21, 0
      %s218 = sadd.s32 %s217, %s215
      %s219 = smul.addr %s218, 4
      %s220 = scalar_lea.vmem %s2, %s219
      %p221 = pneg %p112
      %p222 = pneg %p109
      %p223 = pneg %p140
      %p224 = pneg %p137
      %p225 = scmp.lt.s32.totalorder %s19, 7
      %s226 = scalar_select %p225, %s19, 7
      %p227 = scmp.lt.s32.totalorder %s20, 0
      %s228 = scalar_select %p227, %s20, 0
      %s229 = sadd.s32 %s228, %s226
      %s230 = smul.addr %s229, 4
      %s231 = scalar_lea.vmem %s3, %s230
      %p232 = scmp.lt.s32.totalorder %s19, 7
      %s233 = scalar_select %p232, %s19, 7
      %p234 = scmp.lt.s32.totalorder %s20, 0
      %s235 = scalar_select %p234, %s20, 0
      %s236 = sadd.s32 %s235, %s233
      %s237 = smul.addr %s236, 4
      %s238 = scalar_lea.vmem %s0, %s237
      %p239 = scmp.lt.s32.totalorder %s19, 7
      %s240 = scalar_select %p239, %s19, 7
      %p241 = scmp.lt.s32.totalorder %s21, 0
      %s242 = scalar_select %p241, %s21, 0
      %s243 = sadd.s32 %s242, %s240
      %s244 = smul.addr %s243, 4
      %s245 = scalar_lea.vmem %s1, %s244
      %p246 = scmp.lt.s32.totalorder %s19, 7
      %s247 = scalar_select %p246, %s19, 7
      %p248 = scmp.lt.s32.totalorder %s21, 0
      %s249 = scalar_select %p248, %s21, 0
      %s250 = sadd.s32 %s249, %s247
      %s251 = smul.addr %s250, 4
      %s252 = scalar_lea.vmem %s2, %s251
      %p253 = scmp.lt.s32.totalorder %s19, 7
      %s254 = scalar_select %p253, %s19, 7
      %p255 = scmp.lt.s32.totalorder %s20, 0
      %s256 = scalar_select %p255, %s20, 0
      %s257 = sadd.s32 %s256, %s254
      %s258 = smul.addr %s257, 4
      %s259 = scalar_lea.vmem %s3, %s258
      %p261 = scmp.eq.s32.totalorder %s21, 0
      // Predicated region
      $region33: #{_lambda_.14} parent=31 // pred_check
        %p262 = pneg %p261
      $region34: #{_lambda_.14} parent=31 // pred_check_branch
        %264 = sbr.rel (%p262) target = $region36
      $region35: #{_lambda_.14} parent=31 // pred_region
        %vm265 = vcmask 7168
        %266 = vst.msk [vmem:[#allocation2] sm:$0xff] %vm265, -inf
        %267 = vst.msk [vmem:[#allocation3] sm:$0xff] %vm265, 0.0
        %vm268 = vcmask 64512
        %269 = vst.msk [vmem:[#allocation4] sm:$0xff] %vm268, 0.0
      $region36: #{_lambda_.14} parent=31 // pred_fallthru
        _
      %v270 = vld [vmem:[%s238] sm:$0xf]
      %v271 = vld [vmem:[%s245] sm:$0xf]
      %v272 = vld [vmem:[%s252] sm:$0xf]
      %vm273 = vcmask 64512
      %v275 = vsel %vm273, %v270, 0
      %v278 = vsel %vm273, %v271, 0
      %280 = vmatpush.bf16.xpose.msra.mxu0 0
      %281 = vmatpush.bf16.xpose.msra.mxu0 0
      %282 = vmatpush.bf16.xpose.msra.mxu0 0
      %283 = vmatpush.bf16.xpose.msra.mxu0 0
      %284 = vmatpush.bf16.xpose.msra.mxu0 0
      %285 = vmatpush.bf16.xpose.msra.mxu0 0
      %286 = vmatpush.bf16.xpose.msra.mxu0 0
      %287 = vmatpush.bf16.xpose.msra.mxu0 %v278
      %288 = vmatmul.bf16.gmra.mxu0 %v275
      %v289 = vpop.f32.mrf.mxu0
      %v290 = vadd.f32 0.0, %v289
      %v291 = vpop.f32.mrf.mxu0
      %292 = vdwg.mxu0
      %v293 = vmul.f32 %v290, 0.35355338
      %v294 = vld [vmem:[#allocation2] sm:$0xff]
      %v295 = vsel %vm273, %v293, -inf
      %296 = vmax.xlane.f32.xlu0 %v295
      %v297 = vpop.xlane.xlu0 %296
      %v298 = vmax.f32 %v294, %v297
      %v299 = vsub.f32 %v294, %v298
      %v300 = vmul.f32 %v299, 1.442695
      %v301 = vpow.pop %v300
      %303 = vset.pattern.permute.xlu0 0
      %304 = vperm.xlu0 %303, %v298
      %v305 = vpop.permute.xlu0 %304
      %v307 = vsub.f32 %v293, %v305
      %v308 = vmul.f32 %v307, 1.442695
      %v309 = vpow.pop %v308
      %v310 = vld [vmem:[#allocation3] sm:$0xff]
      %v311 = vmul.f32 %v301, %v310
      %v312 = vsel %vm273, %v309, 0.0
      %313 = vadd.xlane.f32.xlu0 %v312
      %v314 = vpop.xlane.xlu0 %313
      %v315 = vadd.f32 %v311, %v314
      %vm316 = vcmask 7168
      %317 = vst.msk [vmem:[#allocation3] sm:$0xff] %vm316, %v315
      %v318 = vld [vmem:[#allocation4] sm:$0xff]
      %320 = vset.pattern.permute.xlu0 0
      %321 = vperm.xlu0 %320, %v301
      %v322 = vpop.permute.xlu0 %321
      %v324 = vmul.f32 %v322, %v318
      %v325 = vpack.c.bf16 %v309, %v309
      %v327 = vsel %vm273, %v325, 0
      %vm329 = vcmask 1043456
      %v331 = vsel %vm329, %v272, 0
      %333 = vmatpush.bf16.msra.mxu0 0
      %334 = vmatpush.bf16.msra.mxu0 0
      %335 = vmatpush.bf16.msra.mxu0 0
      %336 = vmatpush.bf16.msra.mxu0 0
      %337 = vmatpush.bf16.msra.mxu0 0
      %338 = vmatpush.bf16.msra.mxu0 0
      %339 = vmatpush.bf16.msra.mxu0 0
      %340 = vmatpush.bf16.msra.mxu0 %v331
      %341 = vmatmul.bf16.gmra.mxu0 %v327
      %v342 = vpop.f32.mrf.mxu0
      %v343 = vadd.f32 0.0, %v342
      %v344 = vpop.f32.mrf.mxu0
      %345 = vdwg.mxu0
      %v346 = vadd.f32 %v324, %v343
      %347 = vst.msk [vmem:[#allocation4] sm:$0xff] %vm273, %v346
      %348 = vst.msk [vmem:[#allocation2] sm:$0xff] %vm316, %v298
      // Predicated region
      $region37: #{_lambda_.14} parent=31 // pred_check
        %p349 = pneg %p261
      $region38: #{_lambda_.14} parent=31 // pred_check_branch
        %351 = sbr.rel (%p349) target = $region40
      $region39: #{_lambda_.14} parent=31 // pred_region
        %v352 = vld [vmem:[#allocation3] sm:$0xff]
        %v353 = vrcp.pop %v352
        %v354 = vld [vmem:[#allocation4] sm:$0xff]
        %356 = vset.pattern.permute.xlu0 0
        %357 = vperm.xlu0 %356, %v353
        %v358 = vpop.permute.xlu0 %357
        %v360 = vmul.f32 %v354, %v358
        %v361 = vpack.c.bf16 %v360, %v360
        %vm362 = vcmask 60416
        %363 = vst.msk [vmem:[%s259] sm:$0xf] %vm362, %v361
      $region40: #{_lambda_.14} parent=31 // pred_fallthru
        _
      %p364 = scmp.lt.s32.totalorder %s19, 7
      %s365 = scalar_select %p364, %s19, 7
      %p366 = scmp.lt.s32.totalorder %s20, 0
      %s367 = scalar_select %p366, %s20, 0
      %s368 = sadd.s32 %s367, %s365
      %s369 = smul.addr %s368, 4
      %s370 = scalar_lea.vmem %s3, %s369
      // Predicated region
      $region41: #{_lambda_.14} parent=31 // pred_check
        %p371 = pneg %p137
      $region42: #{_lambda_.14} parent=31 // pred_check_branch
        %373 = sbr.rel (%p371) target = $region44
      $region43: #{_lambda_.14} parent=31 // pred_region
        _
      $region44: #{_lambda_.14} parent=31 // pred_fallthru
        _
    $region32: #{_lambda_.14} parent=5 // pred_fallthru
      _
    %p374 = scmp.le.s32.totalorder 2, %s9
    // Predicated region
    $region45: #{_lambda_.14} parent=5 // pred_check
      %p375 = pneg %p374
    $region46: #{_lambda_.14} parent=5 // pred_check_branch
      %377 = sbr.rel (%p375) target = $region48
    $region47: #{_lambda_.14} parent=5 // pred_region
      %s378 = ssub.s32 %s9, 2
      // Predicated region
      $region49: #{_lambda_.14} parent=47 // pred_check
        %p379 = pneg %p143
      $region50: #{_lambda_.14} parent=47 // pred_check_branch
        %381 = sbr.rel (%p379) target = $region52
      $region51: #{_lambda_.14} parent=47 // pred_region
        %p382 = scmp.lt.s32.totalorder %s22, 7
        %s383 = scalar_select %p382, %s22, 7
        %p384 = scmp.lt.s32.totalorder %s23, 0
        %s385 = scalar_select %p384, %s23, 0
        %s386 = sadd.s32 %s385, %s383
        %s387 = smul.addr %s386, 4
        %s388 = scalar_lea.vmem %s3, %s387
      $region52: #{_lambda_.14} parent=47 // pred_fallthru
        _
    $region48: #{_lambda_.14} parent=5 // pred_fallthru
      _
  $region6: #{_lambda_.14} parent=0 // loop_footer
    %s13 = sadd.s32 1, %s9
  $region7: #{_lambda_.14} parent=0 // loop_footer_branch
    %8 = sbr.rel target = $region3
  $region8: #{_lambda_.14} parent=0 // loop_exit
    _

// kernel: _lambda_.15
$region0: #{_lambda_.15}
  #allocation0 [shape = 'u32[]', space=smem, size = 0x4, offset = 0x4, fixed_abs, tag = 'smem constant byte address 0x4 - core index']
  #allocation1 [shape = 'u32[72,128]{1,0:T(1,128)}', space=vmem, size = 0x9000, scoped, tag = 'internal scratch']
  #allocation2 [shape = 'f32[16,32]{1,0:T(8,128)}', space=vmem, size = 0x2000, scoped, tag = 'scratch operand']
  %s0 = inlined_call_operand.vmem [shape: bf16[16,32], index: 0, kind: input, shape index: {}]
  %s1 = inlined_call_operand.vmem [shape: bf16[32,32], index: 1, kind: input, shape index: {}]
  %s2 = inlined_call_operand.vmem [shape: f32[1,32], index: 2, kind: input, shape index: {}, may-alias: {2,5}]
  %s3 = inlined_call_operand.vmem [shape: bf16[16,32], index: 3, kind: input, shape index: {}]
  %s4 = inlined_call_operand.vmem [shape: f32[1,32], index: 4, kind: input, shape index: {}]
  %s5 = inlined_call_operand.vmem [shape: f32[1,32], index: 5, kind: input, shape index: {}, may-alias: {2,5}]
  %s6 = inlined_call_operand.vmem [shape: bf16[16,32], index: 6, kind: output, shape index: {}]
  %s7 = sld [smem:[#allocation0]]
  $region42: #{_lambda_.15} parent=0
    _
  %s9 = ssub.s32 1, %s7
  %s10 = scalar_select 0, %s9, %s7
  // Predicated region
  $region2: #{_lambda_.15} parent=0 // pred_check
    _
  $region3: #{_lambda_.15} parent=0 // pred_check_branch
    %12 = sbr.rel (0) target = $region5
  $region4: #{_lambda_.15} parent=0 // pred_region
    _
  $region5: #{_lambda_.15} parent=0 // pred_fallthru
    _
  // Predicated region
  $region6: #{_lambda_.15} parent=0 // pred_check
    _
  $region7: #{_lambda_.15} parent=0 // pred_check_branch
    %14 = sbr.rel (0) target = $region9
  $region8: #{_lambda_.15} parent=0 // pred_region
    _
  $region9: #{_lambda_.15} parent=0 // pred_fallthru
    _
  // Predicated region
  $region10: #{_lambda_.15} parent=0 // pred_check
    _
  $region11: #{_lambda_.15} parent=0 // pred_check_branch
    %16 = sbr.rel (0) target = $region13
  $region12: #{_lambda_.15} parent=0 // pred_region
    _
  $region13: #{_lambda_.15} parent=0 // pred_fallthru
    _
  // Predicated region
  $region14: #{_lambda_.15} parent=0 // pred_check
    _
  $region15: #{_lambda_.15} parent=0 // pred_check_branch
    %18 = sbr.rel (0) target = $region17
  $region16: #{_lambda_.15} parent=0 // pred_region
    _
  $region17: #{_lambda_.15} parent=0 // pred_fallthru
    _
  // Predicated region
  $region18: #{_lambda_.15} parent=0 // pred_check
    _
  $region19: #{_lambda_.15} parent=0 // pred_check_branch
    %20 = sbr.rel (0) target = $region21
  $region20: #{_lambda_.15} parent=0 // pred_region
    _
  $region21: #{_lambda_.15} parent=0 // pred_fallthru
    _
  // Predicated region
  $region22: #{_lambda_.15} parent=0 // pred_check
    _
  $region23: #{_lambda_.15} parent=0 // pred_check_branch
    %22 = sbr.rel (0) target = $region25
  $region24: #{_lambda_.15} parent=0 // pred_region
    _
  $region25: #{_lambda_.15} parent=0 // pred_fallthru
    _
  %p24 = scmp.eq.s32.totalorder 0, 0
  // Predicated region
  $region26: #{_lambda_.15} parent=0 // pred_check
    %p25 = pneg %p24
  $region27: #{_lambda_.15} parent=0 // pred_check_branch
    %27 = sbr.rel (%p25) target = $region29
  $region28: #{_lambda_.15} parent=0 // pred_region
    %vm28 = vcmask 261120
    %29 = vst.msk [vmem:[#allocation2] sm:$0xff] %vm28, 0.0
    %30 = vst.msk [vmem:[#allocation2 + $0x8] sm:$0xff] %vm28, 0.0
  $region29: #{_lambda_.15} parent=0 // pred_fallthru
    _
  %v31 = vld [vmem:[#allocation2] sm:$0xff]
  %v32 = vld [vmem:[#allocation2 + $0x8] sm:$0xff]
  %v33 = vld [vmem:[%s0] sm:$0xf]
  %v34 = vld [vmem:[%s0 + $0x4] sm:$0xf]
  %v35 = vld [vmem:[%s1] sm:$0xf]
  %v36 = vld [vmem:[%s1 + $0x4] sm:$0xf]
  %v37 = vld [vmem:[%s1 + $0x8] sm:$0xf]
  %v38 = vld [vmem:[%s1 + $0xc] sm:$0xf]
  %v41 = vunpack.c.l.b16 %v33
  %v42 = vunpack.c.l.b16 %v34
  %v43 = vpack.c.b16 %v42, %v41
  %v48 = vunpack.c.l.b16 %v35
  %v49 = vunpack.c.l.b16 %v36
  %v50 = vunpack.c.l.b16 %v37
  %v51 = vunpack.c.l.b16 %v38
  %v52 = vpack.c.b16 %v49, %v48
  %v53 = vpack.c.b16 %v51, %v50
  %vm56 = vcmask 261120
  %v58 = vsel %vm56, %v43, 0
  %60 = vmatpush.bf16.msra.mxu0 0
  %61 = vmatpush.bf16.msra.mxu0 0
  %62 = vmatpush.bf16.msra.mxu0 0
  %63 = vmatpush.bf16.msra.mxu0 0
  %64 = vmatpush.bf16.msra.mxu0 0
  %65 = vmatpush.bf16.msra.mxu0 0
  %66 = vmatpush.bf16.msra.mxu0 %v53
  %67 = vmatpush.bf16.msra.mxu0 %v52
  %68 = vmatmul.bf16.gmra.mxu0 %v58
  %v69 = vpop.f32.mrf.mxu0
  %v70 = vadd.f32 0.0, %v69
  %v71 = vpop.f32.mrf.mxu0
  %v72 = vadd.f32 0.0, %v71
  %73 = vdwg.mxu0
  %v74 = vadd.f32 %v31, %v70
  %v75 = vadd.f32 %v32, %v72
  %76 = vst.msk [vmem:[#allocation2] sm:$0xff] %vm56, %v74
  %77 = vst.msk [vmem:[#allocation2 + $0x8] sm:$0xff] %vm56, %v75
  // Predicated region
  $region30: #{_lambda_.15} parent=0 // pred_check
    %p78 = pneg %p24
  $region31: #{_lambda_.15} parent=0 // pred_check_branch
    %80 = sbr.rel (%p78) target = $region33
  $region32: #{_lambda_.15} parent=0 // pred_region
    %v81 = vld [vmem:[#allocation2] sm:$0xff]
    %v82 = vld [vmem:[#allocation2 + $0x8] sm:$0xff]
    %v83 = vld [vmem:[%s2] sm:$0x1]
    %v85 = vperm.slane %v83, 0
    %v87 = vadd.f32 %v81, %v85
    %v88 = vadd.f32 %v82, %v85
    %v89 = vld [vmem:[%s3] sm:$0xf]
    %v90 = vld [vmem:[%s3 + $0x4] sm:$0xf]
    %v91 = vunpack.c.l.bf16 %v89
    %v92 = vunpack.c.l.bf16 %v90
    %v93 = vadd.f32 %v87, %v91
    %v94 = vadd.f32 %v88, %v92
    %v95 = vsel %vm56, %v93, 0.0
    %96 = vadd.xlane.f32.xlu0 %v95
    %v97 = vpop.xlane.xlu0 %96
    %v98 = vsel %vm56, %v94, 0.0
    %99 = vadd.xlane.f32.xlu0 %v98
    %v100 = vpop.xlane.xlu0 %99
    %v101 = vrcp.pop 32.0
    %v102 = vmul.f32 32.0, %v101
    %v103 = vsub.f32 1.0, %v102
    %v104 = vmul.f32 %v101, %v103
    %v105 = vadd.f32 %v101, %v104
    %vm106 = vweird.f32 %v101
    %v107 = vsel %vm106, %v101, %v105
    %v108 = vmul.f32 %v97, %v107
    %v109 = vmul.f32 %v100, %v107
    %v110 = vsub.f32 %v93, %v108
    %v111 = vsub.f32 %v94, %v109
    %v112 = vmul.f32 %v110, %v110
    %v113 = vmul.f32 %v111, %v111
    %v114 = vsel %vm56, %v112, 0.0
    %115 = vadd.xlane.f32.xlu0 %v114
    %v116 = vpop.xlane.xlu0 %115
    %v117 = vsel %vm56, %v113, 0.0
    %118 = vadd.xlane.f32.xlu0 %v117
    %v119 = vpop.xlane.xlu0 %118
    %v120 = vmul.f32 %v116, %v107
    %v121 = vmul.f32 %v119, %v107
    %v122 = vadd.f32 %v120, 1e-12
    %v123 = vadd.f32 %v121, 1e-12
    %v124 = vrsqrt.pop %v122
    %v125 = vmul.f32 %v124, %v122
    %v126 = vmul.f32 %v125, %v124
    %v127 = vmul.f32 0.5, %v126
    %v128 = vsub.f32 1.5, %v127
    %v129 = vmul.f32 %v124, %v128
    %vm130 = vweird.f32 %v122
    %vm131 = vweird.f32 %v124
    %vm132 = vmor %vm130, %vm131
    %v133 = vsel %vm132, %v124, %v129
    %v134 = vrsqrt.pop %v123
    %v135 = vmul.f32 %v134, %v123
    %v136 = vmul.f32 %v135, %v134
    %v137 = vmul.f32 0.5, %v136
    %v138 = vsub.f32 1.5, %v137
    %v139 = vmul.f32 %v134, %v138
    %vm140 = vweird.f32 %v123
    %vm141 = vweird.f32 %v134
    %vm142 = vmor %vm140, %vm141
    %v143 = vsel %vm142, %v134, %v139
    %v144 = vmul.f32 %v110, %v133
    %v145 = vmul.f32 %v111, %v143
    %v146 = vld [vmem:[%s4] sm:$0x1]
    %v148 = vperm.slane %v146, 0
    %v150 = vmul.f32 %v144, %v148
    %v151 = vmul.f32 %v145, %v148
    %v152 = vld [vmem:[%s5] sm:$0x1]
    %v154 = vperm.slane %v152, 0
    %v156 = vadd.f32 %v150, %v154
    %v157 = vadd.f32 %v151, %v154
    %v158 = vpack.c.bf16 %v156, %v156
    %v159 = vpack.c.bf16 %v157, %v157
    %vm160 = vcmask 257024
    %161 = vst.msk [vmem:[%s6] sm:$0xf] %vm160, %v158
    %162 = vst.msk [vmem:[%s6 + $0x4] sm:$0xf] %vm160, %v159
  $region33: #{_lambda_.15} parent=0 // pred_fallthru
    _
  // Predicated region
  $region34: #{_lambda_.15} parent=0 // pred_check
    _
  $region35: #{_lambda_.15} parent=0 // pred_check_branch
    %164 = sbr.rel (0) target = $region37
  $region36: #{_lambda_.15} parent=0 // pred_region
    _
  $region37: #{_lambda_.15} parent=0 // pred_fallthru
    _
  // Predicated region
  $region38: #{_lambda_.15} parent=0 // pred_check
    _
  $region39: #{_lambda_.15} parent=0 // pred_check_branch
    %166 = sbr.rel (0) target = $region41
  $region40: #{_lambda_.15} parent=0 // pred_region
    _
  $region41: #{_lambda_.15} parent=0 // pred_fallthru
    _

// kernel: _lambda_.16
$region0: #{_lambda_.16}
  #allocation0 [shape = 'u32[]', space=smem, size = 0x4, offset = 0x4, fixed_abs, tag = 'smem constant byte address 0x4 - core index']
  #allocation1 [shape = 'u32[72,128]{1,0:T(1,128)}', space=vmem, size = 0x9000, scoped, tag = 'internal scratch']
  #allocation2 [shape = 'f32[16,64]{1,0:T(8,128)}', space=vmem, size = 0x2000, scoped, tag = 'scratch operand']
  %s0 = inlined_call_operand.vmem [shape: bf16[16,32], index: 0, kind: input, shape index: {}]
  %s1 = inlined_call_operand.vmem [shape: bf16[32,64], index: 1, kind: input, shape index: {}]
  %s2 = inlined_call_operand.vmem [shape: f32[1,64], index: 2, kind: input, shape index: {}]
  %s3 = inlined_call_operand.vmem [shape: bf16[16,64], index: 3, kind: output, shape index: {}]
  %s4 = sld [smem:[#allocation0]]
  $region30: #{_lambda_.16} parent=0
    _
  %s6 = ssub.s32 1, %s4
  %s7 = scalar_select 0, %s6, %s4
  // Predicated region
  $region2: #{_lambda_.16} parent=0 // pred_check
    _
  $region3: #{_lambda_.16} parent=0 // pred_check_branch
    %9 = sbr.rel (0) target = $region5
  $region4: #{_lambda_.16} parent=0 // pred_region
    _
  $region5: #{_lambda_.16} parent=0 // pred_fallthru
    _
  // Predicated region
  $region6: #{_lambda_.16} parent=0 // pred_check
    _
  $region7: #{_lambda_.16} parent=0 // pred_check_branch
    %11 = sbr.rel (0) target = $region9
  $region8: #{_lambda_.16} parent=0 // pred_region
    _
  $region9: #{_lambda_.16} parent=0 // pred_fallthru
    _
  // Predicated region
  $region10: #{_lambda_.16} parent=0 // pred_check
    _
  $region11: #{_lambda_.16} parent=0 // pred_check_branch
    %13 = sbr.rel (0) target = $region13
  $region12: #{_lambda_.16} parent=0 // pred_region
    _
  $region13: #{_lambda_.16} parent=0 // pred_fallthru
    _
  %p15 = scmp.eq.s32.totalorder 0, 0
  // Predicated region
  $region14: #{_lambda_.16} parent=0 // pred_check
    %p16 = pneg %p15
  $region15: #{_lambda_.16} parent=0 // pred_check_branch
    %18 = sbr.rel (%p16) target = $region17
  $region16: #{_lambda_.16} parent=0 // pred_region
    %vm19 = vcmask 523264
    %20 = vst.msk [vmem:[#allocation2] sm:$0xff] %vm19, 0.0
    %21 = vst.msk [vmem:[#allocation2 + $0x8] sm:$0xff] %vm19, 0.0
  $region17: #{_lambda_.16} parent=0 // pred_fallthru
    _
  %v22 = vld [vmem:[#allocation2] sm:$0xff]
  %v23 = vld [vmem:[#allocation2 + $0x8] sm:$0xff]
  %v24 = vld [vmem:[%s0] sm:$0xf]
  %v25 = vld [vmem:[%s0 + $0x4] sm:$0xf]
  %v26 = vld [vmem:[%s1] sm:$0xf]
  %v27 = vld [vmem:[%s1 + $0x4] sm:$0xf]
  %v28 = vld [vmem:[%s1 + $0x8] sm:$0xf]
  %v29 = vld [vmem:[%s1 + $0xc] sm:$0xf]
  %v32 = vunpack.c.l.b16 %v24
  %v33 = vunpack.c.l.b16 %v25
  %v34 = vpack.c.b16 %v33, %v32
  %v39 = vunpack.c.l.b16 %v26
  %v40 = vunpack.c.l.b16 %v27
  %v41 = vunpack.c.l.b16 %v28
  %v42 = vunpack.c.l.b16 %v29
  %v43 = vpack.c.b16 %v40, %v39
  %v44 = vpack.c.b16 %v42, %v41
  %vm47 = vcmask 261120
  %v49 = vsel %vm47, %v34, 0
  %51 = vmatpush.bf16.msra.mxu0 0
  %52 = vmatpush.bf16.msra.mxu0 0
  %53 = vmatpush.bf16.msra.mxu0 0
  %54 = vmatpush.bf16.msra.mxu0 0
  %55 = vmatpush.bf16.msra.mxu0 0
  %56 = vmatpush.bf16.msra.mxu0 0
  %57 = vmatpush.bf16.msra.mxu0 %v44
  %58 = vmatpush.bf16.msra.mxu0 %v43
  %59 = vmatmul.bf16.gmra.mxu0 %v49
  %v60 = vpop.f32.mrf.mxu0
  %v61 = vadd.f32 0.0, %v60
  %v62 = vpop.f32.mrf.mxu0
  %v63 = vadd.f32 0.0, %v62
  %64 = vdwg.mxu0
  %v65 = vadd.f32 %v22, %v61
  %v66 = vadd.f32 %v23, %v63
  %vm67 = vcmask 523264
  %68 = vst.msk [vmem:[#allocation2] sm:$0xff] %vm67, %v65
  %69 = vst.msk [vmem:[#allocation2 + $0x8] sm:$0xff] %vm67, %v66
  // Predicated region
  $region18: #{_lambda_.16} parent=0 // pred_check
    %p70 = pneg %p15
  $region19: #{_lambda_.16} parent=0 // pred_check_branch
    %72 = sbr.rel (%p70) target = $region21
  $region20: #{_lambda_.16} parent=0 // pred_region
    %v73 = vld [vmem:[#allocation2] sm:$0xff]
    %v74 = vld [vmem:[#allocation2 + $0x8] sm:$0xff]
    %v75 = vld [vmem:[%s2] sm:$0x1]
    %v77 = vperm.slane %v75, 0
    %v79 = vadd.f32 %v73, %v77
    %v80 = vadd.f32 %v74, %v77
    %v81 = vmul.f32 %v79, 0.5
    %v82 = vmul.f32 %v80, 0.5
    %v83 = vmul.f32 %v79, 0.044715
    %v84 = vmul.f32 %v80, 0.044715
    %v85 = vmul.f32 %v83, %v79
    %v86 = vmul.f32 %v84, %v80
    %v87 = vmul.f32 %v85, %v79
    %v88 = vmul.f32 %v86, %v80
    %v89 = vadd.f32 %v79, %v87
    %v90 = vadd.f32 %v80, %v88
    %v91 = vmul.f32 %v89, 0.7978846
    %v92 = vmul.f32 %v90, 0.7978846
    %v93 = vtanh.pop %v91
    %v94 = vtanh.pop %v92
    %v95 = vadd.f32 %v93, 1.0
    %v96 = vadd.f32 %v94, 1.0
    %v97 = vmul.f32 %v81, %v95
    %v98 = vmul.f32 %v82, %v96
    %v99 = vpack.c.bf16 %v97, %v97
    %v100 = vpack.c.bf16 %v98, %v98
    %vm101 = vcmask 519168
    %102 = vst.msk [vmem:[%s3] sm:$0xf] %vm101, %v99
    %103 = vst.msk [vmem:[%s3 + $0x4] sm:$0xf] %vm101, %v100
  $region21: #{_lambda_.16} parent=0 // pred_fallthru
    _
  // Predicated region
  $region22: #{_lambda_.16} parent=0 // pred_check
    _
  $region23: #{_lambda_.16} parent=0 // pred_check_branch
    %105 = sbr.rel (0) target = $region25
  $region24: #{_lambda_.16} parent=0 // pred_region
    _
  $region25: #{_lambda_.16} parent=0 // pred_fallthru
    _
  // Predicated region
  $region26: #{_lambda_.16} parent=0 // pred_check
    _
  $region27: #{_lambda_.16} parent=0 // pred_check_branch
    %107 = sbr.rel (0) target = $region29
  $region28: #{_lambda_.16} parent=0 // pred_region
    _
  $region29: #{_lambda_.16} parent=0 // pred_fallthru
    _

// kernel: _lambda_.17
$region0: #{_lambda_.17}
  #allocation0 [shape = 'u32[]', space=smem, size = 0x4, offset = 0x4, fixed_abs, tag = 'smem constant byte address 0x4 - core index']
  #allocation1 [shape = 'u32[72,128]{1,0:T(1,128)}', space=vmem, size = 0x9000, scoped, tag = 'internal scratch']
  #allocation2 [shape = 'f32[16,32]{1,0:T(8,128)}', space=vmem, size = 0x2000, scoped, tag = 'scratch operand']
  %s0 = inlined_call_operand.vmem [shape: bf16[16,64], index: 0, kind: input, shape index: {}]
  %s1 = inlined_call_operand.vmem [shape: bf16[64,32], index: 1, kind: input, shape index: {}]
  %s2 = inlined_call_operand.vmem [shape: f32[1,32], index: 2, kind: input, shape index: {}, may-alias: {2,5}]
  %s3 = inlined_call_operand.vmem [shape: bf16[16,32], index: 3, kind: input, shape index: {}]
  %s4 = inlined_call_operand.vmem [shape: f32[1,32], index: 4, kind: input, shape index: {}]
  %s5 = inlined_call_operand.vmem [shape: f32[1,32], index: 5, kind: input, shape index: {}, may-alias: {2,5}]
  %s6 = inlined_call_operand.vmem [shape: bf16[16,32], index: 6, kind: output, shape index: {}]
  %s7 = sld [smem:[#allocation0]]
  $region42: #{_lambda_.17} parent=0
    _
  %s9 = ssub.s32 1, %s7
  %s10 = scalar_select 0, %s9, %s7
  // Predicated region
  $region2: #{_lambda_.17} parent=0 // pred_check
    _
  $region3: #{_lambda_.17} parent=0 // pred_check_branch
    %12 = sbr.rel (0) target = $region5
  $region4: #{_lambda_.17} parent=0 // pred_region
    _
  $region5: #{_lambda_.17} parent=0 // pred_fallthru
    _
  // Predicated region
  $region6: #{_lambda_.17} parent=0 // pred_check
    _
  $region7: #{_lambda_.17} parent=0 // pred_check_branch
    %14 = sbr.rel (0) target = $region9
  $region8: #{_lambda_.17} parent=0 // pred_region
    _
  $region9: #{_lambda_.17} parent=0 // pred_fallthru
    _
  // Predicated region
  $region10: #{_lambda_.17} parent=0 // pred_check
    _
  $region11: #{_lambda_.17} parent=0 // pred_check_branch
    %16 = sbr.rel (0) target = $region13
  $region12: #{_lambda_.17} parent=0 // pred_region
    _
  $region13: #{_lambda_.17} parent=0 // pred_fallthru
    _
  // Predicated region
  $region14: #{_lambda_.17} parent=0 // pred_check
    _
  $region15: #{_lambda_.17} parent=0 // pred_check_branch
    %18 = sbr.rel (0) target = $region17
  $region16: #{_lambda_.17} parent=0 // pred_region
    _
  $region17: #{_lambda_.17} parent=0 // pred_fallthru
    _
  // Predicated region
  $region18: #{_lambda_.17} parent=0 // pred_check
    _
  $region19: #{_lambda_.17} parent=0 // pred_check_branch
    %20 = sbr.rel (0) target = $region21
  $region20: #{_lambda_.17} parent=0 // pred_region
    _
  $region21: #{_lambda_.17} parent=0 // pred_fallthru
    _
  // Predicated region
  $region22: #{_lambda_.17} parent=0 // pred_check
    _
  $region23: #{_lambda_.17} parent=0 // pred_check_branch
    %22 = sbr.rel (0) target = $region25
  $region24: #{_lambda_.17} parent=0 // pred_region
    _
  $region25: #{_lambda_.17} parent=0 // pred_fallthru
    _
  %p24 = scmp.eq.s32.totalorder 0, 0
  // Predicated region
  $region26: #{_lambda_.17} parent=0 // pred_check
    %p25 = pneg %p24
  $region27: #{_lambda_.17} parent=0 // pred_check_branch
    %27 = sbr.rel (%p25) target = $region29
  $region28: #{_lambda_.17} parent=0 // pred_region
    %vm28 = vcmask 261120
    %29 = vst.msk [vmem:[#allocation2] sm:$0xff] %vm28, 0.0
    %30 = vst.msk [vmem:[#allocation2 + $0x8] sm:$0xff] %vm28, 0.0
  $region29: #{_lambda_.17} parent=0 // pred_fallthru
    _
  %v31 = vld [vmem:[#allocation2] sm:$0xff]
  %v32 = vld [vmem:[#allocation2 + $0x8] sm:$0xff]
  %v33 = vld [vmem:[%s0] sm:$0xf]
  %v34 = vld [vmem:[%s0 + $0x4] sm:$0xf]
  %v35 = vld [vmem:[%s1] sm:$0xf]
  %v36 = vld [vmem:[%s1 + $0x4] sm:$0xf]
  %v37 = vld [vmem:[%s1 + $0x8] sm:$0xf]
  %v38 = vld [vmem:[%s1 + $0xc] sm:$0xf]
  %v39 = vld [vmem:[%s1 + $0x10] sm:$0xf]
  %v40 = vld [vmem:[%s1 + $0x14] sm:$0xf]
  %v41 = vld [vmem:[%s1 + $0x18] sm:$0xf]
  %v42 = vld [vmem:[%s1 + $0x1c] sm:$0xf]
  %v45 = vunpack.c.l.b16 %v33
  %v46 = vunpack.c.l.b16 %v34
  %v47 = vpack.c.b16 %v46, %v45
  %v56 = vunpack.c.l.b16 %v35
  %v57 = vunpack.c.l.b16 %v36
  %v58 = vunpack.c.l.b16 %v37
  %v59 = vunpack.c.l.b16 %v38
  %v60 = vunpack.c.l.b16 %v39
  %v61 = vunpack.c.l.b16 %v40
  %v62 = vunpack.c.l.b16 %v41
  %v63 = vunpack.c.l.b16 %v42
  %v64 = vpack.c.b16 %v57, %v56
  %v65 = vpack.c.b16 %v59, %v58
  %v66 = vpack.c.b16 %v61, %v60
  %v67 = vpack.c.b16 %v63, %v62
  %vm72 = vcmask 523264
  %v74 = vsel %vm72, %v47, 0
  %76 = vmatpush.bf16.msra.mxu0 0
  %77 = vmatpush.bf16.msra.mxu0 0
  %78 = vmatpush.bf16.msra.mxu0 0
  %79 = vmatpush.bf16.msra.mxu0 0
  %80 = vmatpush.bf16.msra.mxu0 %v67
  %81 = vmatpush.bf16.msra.mxu0 %v66
  %82 = vmatpush.bf16.msra.mxu0 %v65
  %83 = vmatpush.bf16.msra.mxu0 %v64
  %84 = vmatmul.bf16.gmra.mxu0 %v74
  %v85 = vpop.f32.mrf.mxu0
  %v86 = vadd.f32 0.0, %v85
  %v87 = vpop.f32.mrf.mxu0
  %v88 = vadd.f32 0.0, %v87
  %89 = vdwg.mxu0
  %v90 = vadd.f32 %v31, %v86
  %v91 = vadd.f32 %v32, %v88
  %vm92 = vcmask 261120
  %93 = vst.msk [vmem:[#allocation2] sm:$0xff] %vm92, %v90
  %94 = vst.msk [vmem:[#allocation2 + $0x8] sm:$0xff] %vm92, %v91
  // Predicated region
  $region30: #{_lambda_.17} parent=0 // pred_check
    %p95 = pneg %p24
  $region31: #{_lambda_.17} parent=0 // pred_check_branch
    %97 = sbr.rel (%p95) target = $region33
  $region32: #{_lambda_.17} parent=0 // pred_region
    %v98 = vld [vmem:[#allocation2] sm:$0xff]
    %v99 = vld [vmem:[#allocation2 + $0x8] sm:$0xff]
    %v100 = vld [vmem:[%s2] sm:$0x1]
    %v102 = vperm.slane %v100, 0
    %v104 = vadd.f32 %v98, %v102
    %v105 = vadd.f32 %v99, %v102
    %v106 = vld [vmem:[%s3] sm:$0xf]
    %v107 = vld [vmem:[%s3 + $0x4] sm:$0xf]
    %v108 = vunpack.c.l.bf16 %v106
    %v109 = vunpack.c.l.bf16 %v107
    %v110 = vadd.f32 %v104, %v108
    %v111 = vadd.f32 %v105, %v109
    %v112 = vsel %vm92, %v110, 0.0
    %113 = vadd.xlane.f32.xlu0 %v112
    %v114 = vpop.xlane.xlu0 %113
    %v115 = vsel %vm92, %v111, 0.0
    %116 = vadd.xlane.f32.xlu0 %v115
    %v117 = vpop.xlane.xlu0 %116
    %v118 = vrcp.pop 32.0
    %v119 = vmul.f32 32.0, %v118
    %v120 = vsub.f32 1.0, %v119
    %v121 = vmul.f32 %v118, %v120
    %v122 = vadd.f32 %v118, %v121
    %vm123 = vweird.f32 %v118
    %v124 = vsel %vm123, %v118, %v122
    %v125 = vmul.f32 %v114, %v124
    %v126 = vmul.f32 %v117, %v124
    %v127 = vsub.f32 %v110, %v125
    %v128 = vsub.f32 %v111, %v126
    %v129 = vmul.f32 %v127, %v127
    %v130 = vmul.f32 %v128, %v128
    %v131 = vsel %vm92, %v129, 0.0
    %132 = vadd.xlane.f32.xlu0 %v131
    %v133 = vpop.xlane.xlu0 %132
    %v134 = vsel %vm92, %v130, 0.0
    %135 = vadd.xlane.f32.xlu0 %v134
    %v136 = vpop.xlane.xlu0 %135
    %v137 = vmul.f32 %v133, %v124
    %v138 = vmul.f32 %v136, %v124
    %v139 = vadd.f32 %v137, 1e-12
    %v140 = vadd.f32 %v138, 1e-12
    %v141 = vrsqrt.pop %v139
    %v142 = vmul.f32 %v141, %v139
    %v143 = vmul.f32 %v142, %v141
    %v144 = vmul.f32 0.5, %v143
    %v145 = vsub.f32 1.5, %v144
    %v146 = vmul.f32 %v141, %v145
    %vm147 = vweird.f32 %v139
    %vm148 = vweird.f32 %v141
    %vm149 = vmor %vm147, %vm148
    %v150 = vsel %vm149, %v141, %v146
    %v151 = vrsqrt.pop %v140
    %v152 = vmul.f32 %v151, %v140
    %v153 = vmul.f32 %v152, %v151
    %v154 = vmul.f32 0.5, %v153
    %v155 = vsub.f32 1.5, %v154
    %v156 = vmul.f32 %v151, %v155
    %vm157 = vweird.f32 %v140
    %vm158 = vweird.f32 %v151
    %vm159 = vmor %vm157, %vm158
    %v160 = vsel %vm159, %v151, %v156
    %v161 = vmul.f32 %v127, %v150
    %v162 = vmul.f32 %v128, %v160
    %v163 = vld [vmem:[%s4] sm:$0x1]
    %v165 = vperm.slane %v163, 0
    %v167 = vmul.f32 %v161, %v165
    %v168 = vmul.f32 %v162, %v165
    %v169 = vld [vmem:[%s5] sm:$0x1]
    %v171 = vperm.slane %v169, 0
    %v173 = vadd.f32 %v167, %v171
    %v174 = vadd.f32 %v168, %v171
    %v175 = vpack.c.bf16 %v173, %v173
    %v176 = vpack.c.bf16 %v174, %v174
    %vm177 = vcmask 257024
    %178 = vst.msk [vmem:[%s6] sm:$0xf] %vm177, %v175
    %179 = vst.msk [vmem:[%s6 + $0x4] sm:$0xf] %vm177, %v176
  $region33: #{_lambda_.17} parent=0 // pred_fallthru
    _
  // Predicated region
  $region34: #{_lambda_.17} parent=0 // pred_check
    _
  $region35: #{_lambda_.17} parent=0 // pred_check_branch
    %181 = sbr.rel (0) target = $region37
  $region36: #{_lambda_.17} parent=0 // pred_region
    _
  $region37: #{_lambda_.17} parent=0 // pred_fallthru
    _
  // Predicated region
  $region38: #{_lambda_.17} parent=0 // pred_check
    _
  $region39: #{_lambda_.17} parent=0 // pred_check_branch
    %183 = sbr.rel (0) target = $region41
  $region40: #{_lambda_.17} parent=0 // pred_region
    _
  $region41: #{_lambda_.17} parent=0 // pred_fallthru
    _

// kernel: _lambda_.23
$region0: #{_lambda_.23}
  #allocation0 [shape = 'u32[]', space=smem, size = 0x4, offset = 0x4, fixed_abs, tag = 'smem constant byte address 0x4 - core index']
  #allocation1 [shape = 'u32[72,128]{1,0:T(1,128)}', space=vmem, size = 0x9000, scoped, tag = 'internal scratch']
  #allocation2 [shape = 'f32[2,128]{1,0:T(2,128)}', space=vmem, size = 0x400, scoped, tag = 'scratch operand']
  %s0 = inlined_call_operand.vmem [shape: bf16[2,32], index: 0, kind: input, shape index: {}]
  %s1 = inlined_call_operand.vmem [shape: bf16[32,128], index: 1, kind: input, shape index: {}]
  %s2 = inlined_call_operand.vmem [shape: f32[1,128], index: 2, kind: input, shape index: {}]
  %s3 = inlined_call_operand.hbm [shape: f32[2,128], index: 3, kind: output, shape index: {}]
  %s4 = sld [smem:[#allocation0]]
  $region30: #{_lambda_.23} parent=0
    _
  %s6 = ssub.s32 1, %s4
  %s7 = scalar_select 0, %s6, %s4
  $region1: #{_lambda_.23} parent=0
    #allocation3 [shape = 'u8[1024]{0}', space=vmem, size = 0x400, scoped, tag = 'output window, operand 0, single buffered']
    #allocation4 [shape = 's32[1]{0}', space=sflag, size = 0x4, scoped, tag = 'scoped memory for _lambda_.23']
    %8 = vsyncpa [#allocation4], 0
    // Predicated region
    $region2: #{_lambda_.23} parent=1 // pred_check
      _
    $region3: #{_lambda_.23} parent=1 // pred_check_branch
      %10 = sbr.rel (0) target = $region5
    $region4: #{_lambda_.23} parent=1 // pred_region
      _
    $region5: #{_lambda_.23} parent=1 // pred_fallthru
      _
    // Predicated region
    $region6: #{_lambda_.23} parent=1 // pred_check
      _
    $region7: #{_lambda_.23} parent=1 // pred_check_branch
      %12 = sbr.rel (0) target = $region9
    $region8: #{_lambda_.23} parent=1 // pred_region
      _
    $region9: #{_lambda_.23} parent=1 // pred_fallthru
      _
    // Predicated region
    $region10: #{_lambda_.23} parent=1 // pred_check
      _
    $region11: #{_lambda_.23} parent=1 // pred_check_branch
      %14 = sbr.rel (0) target = $region13
    $region12: #{_lambda_.23} parent=1 // pred_region
      _
    $region13: #{_lambda_.23} parent=1 // pred_fallthru
      _
    %p16 = scmp.eq.s32.totalorder 0, 0
    // Predicated region
    $region14: #{_lambda_.23} parent=1 // pred_check
      %p17 = pneg %p16
    $region15: #{_lambda_.23} parent=1 // pred_check_branch
      %19 = sbr.rel (%p17) target = $region17
    $region16: #{_lambda_.23} parent=1 // pred_region
      %20 = vst [vmem:[#allocation2] sm:$0x3] 0.0
    $region17: #{_lambda_.23} parent=1 // pred_fallthru
      _
    %v21 = vld [vmem:[#allocation2] sm:$0x3]
    %v22 = vld [vmem:[%s0] sm:$0x1]
    %v23 = vld [vmem:[%s1] sm:$0xf]
    %v24 = vld [vmem:[%s1 + $0x4] sm:$0xf]
    %v25 = vld [vmem:[%s1 + $0x8] sm:$0xf]
    %v26 = vld [vmem:[%s1 + $0xc] sm:$0xf]
    %v31 = vunpack.c.l.b16 %v23
    %v32 = vunpack.c.l.b16 %v24
    %v33 = vunpack.c.l.b16 %v25
    %v34 = vunpack.c.l.b16 %v26
    %v35 = vpack.c.b16 %v32, %v31
    %v36 = vpack.c.b16 %v34, %v33
    %vm39 = vcmask 261120
    %v41 = vsel %vm39, %v22, 0
    %43 = vmatpush.bf16.msra.mxu0 0
    %44 = vmatpush.bf16.msra.mxu0 0
    %45 = vmatpush.bf16.msra.mxu0 0
    %46 = vmatpush.bf16.msra.mxu0 0
    %47 = vmatpush.bf16.msra.mxu0 0
    %48 = vmatpush.bf16.msra.mxu0 0
    %49 = vmatpush.bf16.msra.mxu0 %v36
    %50 = vmatpush.bf16.msra.mxu0 %v35
    %51 = vmatmul.bf16.gmra.mxu0 %v41
    %v52 = vpop.f32.mrf.mxu0
    %v53 = vadd.f32 0.0, %v52
    %v54 = vpop.f32.mrf.mxu0
    %55 = vdwg.mxu0
    %v56 = vadd.f32 %v21, %v53
    %57 = vst [vmem:[#allocation2] sm:$0x3] %v56
    // Predicated region
    $region18: #{_lambda_.23} parent=1 // pred_check
      %p58 = pneg %p16
    $region19: #{_lambda_.23} parent=1 // pred_check_branch
      %60 = sbr.rel (%p58) target = $region21
    $region20: #{_lambda_.23} parent=1 // pred_region
      %v61 = vld [vmem:[#allocation2] sm:$0x3]
      %v62 = vld [vmem:[%s2] sm:$0x1]
      %v64 = vperm.slane %v62, 0
      %v66 = vadd.f32 %v61, %v64
      %67 = vst [vmem:[#allocation3] sm:$0x3] %v66
    $region21: #{_lambda_.23} parent=1 // pred_fallthru
      _
    // Predicated region
    $region22: #{_lambda_.23} parent=1 // pred_check
      _
    $region23: #{_lambda_.23} parent=1 // pred_check_branch
      %69 = sbr.rel (0) target = $region25
    $region24: #{_lambda_.23} parent=1 // pred_region
      %71 = vsyncadd [#allocation4], 0
      %s73 = sshll.u32 [#allocation3], 4
      %s74 = int_to_ptr.vmem [resolvable:$true] %s73
      %s75 = sshll.u32 %s3, 4
      %s76 = int_to_ptr.hbm [resolvable:$true] %s75
      %78 = dma.vmem_to_hbm [thread:$0]  %s74, 32, %s76, [#allocation4]
    $region25: #{_lambda_.23} parent=1 // pred_fallthru
      _
    // Predicated region
    $region26: #{_lambda_.23} parent=1 // pred_check
      _
    $region27: #{_lambda_.23} parent=1 // pred_check_branch
      %80 = sbr.rel (0) target = $region29
    $region28: #{_lambda_.23} parent=1 // pred_region
      %82 = dma.done [#allocation4], 32
    $region29: #{_lambda_.23} parent=1 // pred_fallthru
      _
    %83 = vsyncpa [#allocation4], 1

</llo_original>
